<compile_context>
chip_gen: v6e
topology: v6e:2x2x1
jax: 0.10.0
libtpu: 0.0.40
codegen_flags: <defaults>
</compile_context>

<pallas_src>
import functools

import jax
import jax.numpy as jnp
from jax.experimental import pallas as pl
from jax.experimental.pallas import tpu as pltpu

f32 = jnp.float32
bf16 = jnp.bfloat16


def _round_up(x, m):
    return (x + m - 1) // m * m


# ----------------------------------------------------------------------------
# Host-side prep: fold BN/bias (f32), batch branches, pack slabs, im2col input.
# ----------------------------------------------------------------------------
def _prepare_inputs(protein, branch_params, kernels, mlp_params):
    B, L, E = protein.shape
    H = branch_params[0][0].shape[-1]
    nb = len(kernels)
    kmax = max(kernels)
    pad = (kmax - 1) // 2
    Lpad = _round_up(L + 2 * pad, 8)           # sublane-aligned per-batch row block
    HH = nb * H

    # --- conv weights: fold bias+BN(eval) in f32, embed k<kmax taps, batch branches ---
    w1_cols, w2_diag = [], []
    sh1, sl1, sh2, sl2 = [], [], [], []
    for k, prm in zip(kernels, branch_params):
        W1, b1, s1, t1, a1, W2, b2, s2, t2, a2 = prm     # W: [k, Cin, H]
        off = (kmax - k) // 2
        W1f = W1 * s1.reshape(1, 1, H)                   # BN scale folded into weight
        W2f = W2 * s2.reshape(1, 1, H)
        w1_cols.append(jnp.zeros((kmax, E, H), f32).at[off:off + k].set(W1f))
        w2_diag.append(jnp.zeros((kmax, H, H), f32).at[off:off + k].set(W2f))
        sh1.append(b1.reshape(1, H) * s1.reshape(1, H) + t1.reshape(1, H))
        sh2.append(b2.reshape(1, H) * s2.reshape(1, H) + t2.reshape(1, H))
        sl1.append(a1.reshape(1, H))
        sl2.append(a2.reshape(1, H))

    W1_all = jnp.concatenate(w1_cols, axis=-1).reshape(kmax * E, HH)     # [kmax*E, 3H]
    W2_all = jnp.zeros((kmax, HH, HH), f32)                              # block-diag over branches
    for bi in range(nb):
        W2_all = W2_all.at[:, bi * H:(bi + 1) * H, bi * H:(bi + 1) * H].set(w2_diag[bi])
    w_conv = jnp.concatenate([W1_all, W2_all.reshape(kmax * HH, HH)],
                             axis=0).astype(bf16)                        # [kmax*(E+3H), 3H]

    # --- MLP head: fold Linear bias + BN(eval) into weights (f32), then bf16 ---
    MW1, mb1, ms1, mt1, MW2, mb2, ms2, mt2, MW3, mb3 = mlp_params
    w_mlp = jnp.concatenate([MW1 * ms1.reshape(1, H),
                             MW2 * ms2.reshape(1, H),
                             MW3], axis=0).astype(bf16)                  # [3H+H+H, H]
    msh1 = mb1.reshape(1, H) * ms1.reshape(1, H) + mt1.reshape(1, H)
    msh2 = mb2.reshape(1, H) * ms2.reshape(1, H) + mt2.reshape(1, H)

    # --- every per-channel vector packed into ONE (8,128) f32 tile ---
    vec = jnp.zeros((8, 128), f32)
    vec = vec.at[0, :HH].set(jnp.concatenate(sh1, axis=-1)[0])
    vec = vec.at[1, :HH].set(jnp.concatenate(sl1, axis=-1)[0])
    vec = vec.at[2, :HH].set(jnp.concatenate(sh2, axis=-1)[0])
    vec = vec.at[3, :HH].set(jnp.concatenate(sl2, axis=-1)[0])
    vec = vec.at[4, :H].set(msh1[0])
    vec = vec.at[5, :H].set(msh2[0])
    vec = vec.at[6, :H].set(mb3.reshape(H))

    # --- input: zero-pad + im2col in the wrapper (layout only, a few tens of KB) ---
    xpad = jnp.pad(protein, ((0, 0), (pad, pad), (0, 0)))                # [B, L+2p, E]
    patches = jnp.concatenate([xpad[:, t:t + L, :] for t in range(kmax)], axis=-1)
    rows = jnp.zeros((B, Lpad, kmax * E), f32)
    rows = rows.at[:, pad:pad + L, :].set(patches)
    rows = rows.reshape(B * Lpad, kmax * E).astype(bf16)                 # [B*Lpad, kmax*E]

    meta = dict(B=B, L=L, E=E, H=H, nb=nb, kmax=kmax, pad=pad, Lpad=Lpad)
    return rows, w_conv, w_mlp, vec, meta


# ----------------------------------------------------------------------------
# Fused Pallas kernel (whole forward pass, no grid, everything resident in VMEM)
# ----------------------------------------------------------------------------
def _make_kernel(meta):
    B, L, E, H = meta["B"], meta["L"], meta["E"], meta["H"]
    nb, kmax, pad, Lpad = meta["nb"], meta["kmax"], meta["pad"], meta["Lpad"]
    HH = nb * H
    R = B * Lpad

    def shift_rows(y, d):
        """shifted[j] = y[j + d]; rows running off either end become zeros."""
        if d == 0:
            return y
        zeros = jnp.zeros((abs(d), y.shape[1]), y.dtype)
        if d > 0:
            return jnp.concatenate([y[d:, :], zeros], axis=0)
        return jnp.concatenate([zeros, y[:d, :]], axis=0)

    def kernel(rows_ref, wconv_ref, wmlp_ref, vec_ref, o_ref):
        # ---- conv #1, all 3 branches fused: one im2col matmul ----
        y = jnp.dot(rows_ref[...], wconv_ref[:kmax * E, :],
                    preferred_element_type=f32) + vec_ref[0:1, :HH]
        y = jnp.where(y > 0, y, vec_ref[1:2, :HH] * y)          # PReLU
        # zero the padding rows so conv #2 sees true zero padding
        r = jax.lax.broadcasted_iota(jnp.int32, (R, 1), 0)
        valid = functools.reduce(
            jnp.logical_or,
            [(r >= b * Lpad + pad) & (r < b * Lpad + pad + L) for b in range(B)])
        y = jnp.where(valid, y, 0.0)                            # [R, 3H] f32

        # ---- conv #2 (block-diagonal over branches): k-tap shift & accumulate ----
        acc = None
        for t in range(kmax):
            w2_t = wconv_ref[kmax * E + t * HH: kmax * E + (t + 1) * HH, :]
            tap = shift_rows(y, t - pad).astype(bf16)
            d = jnp.dot(tap, w2_t, preferred_element_type=f32)
            acc = d if acc is None else acc + d
        z = acc + vec_ref[2:3, :HH]
        z = jnp.where(z > 0, z, vec_ref[3:4, :HH] * z)          # PReLU  [R, 3H]

        # ---- global max-pool over sequence positions (per batch row) ----
        feats = jnp.concatenate(
            [jnp.max(z[b * Lpad + pad: b * Lpad + pad + L, :], axis=0, keepdims=True)
             for b in range(B)], axis=0)                        # [B, 3H]

        # ---- MLP head (bias+BN folded into weights; Dropout = identity in eval) ----
        # TODO(synk): training-mode dropout would use pltpu.prng_seed / prng_random_bits.
        h = jnp.dot(feats.astype(bf16), wmlp_ref[:HH, :],
                    preferred_element_type=f32) + vec_ref[4:5, :H]
        h = jnp.maximum(h, 0.0)
        h = jnp.dot(h.astype(bf16), wmlp_ref[HH:HH + H, :],
                    preferred_element_type=f32) + vec_ref[5:6, :H]
        h = jnp.maximum(h, 0.0)
        o_ref[...] = jnp.dot(h.astype(bf16), wmlp_ref[HH + H:HH + 2 * H, :],
                             preferred_element_type=f32) + vec_ref[6:7, :H]

    return kernel


# ----------------------------------------------------------------------------
# Wrapper: one fused pallas_call for the whole forward pass
# ----------------------------------------------------------------------------
def textcnn_forward(protein, branch_params, mlp_params, *, kernels):
    """protein: [B, L, E] channels-last (pre-permute torch input). Returns [B, H]."""
    rows, w_conv, w_mlp, vec, meta = _prepare_inputs(protein, branch_params,
                                                     kernels, mlp_params)
    B, H = meta["B"], meta["H"]
    vmem = pl.BlockSpec(memory_space=pltpu.MemorySpace.VMEM)
    return pl.pallas_call(
        _make_kernel(meta),
        out_shape=jax.ShapeDtypeStruct((B, H), f32),
        in_specs=[vmem, vmem, vmem, vmem],
        out_specs=vmem,
    )(rows, w_conv, w_mlp, vec)


# ----------------------------------------------------------------------------
# Pure-JAX reference (same fold-in-f32 / bf16-matmul / f32-accumulate numerics)
# ----------------------------------------------------------------------------
def _branch_ref(x, k, prm):
    W1, b1, s1, t1, a1, W2, b2, s2, t2, a2 = prm
    B, L, _ = x.shape
    H = W1.shape[-1]
    p = (k - 1) // 2

    def conv_bn(inp, W, b, s, t):
        C = inp.shape[-1]
        Wf = (W * s.reshape(1, 1, H)).reshape(k * C, H).astype(bf16)
        sh = b.reshape(1, H) * s.reshape(1, H) + t.reshape(1, H)
        xp = jnp.pad(inp, ((0, 0), (p, p), (0, 0)))
        patches = jnp.concatenate([xp[:, i:i + L, :] for i in range(k)], axis=-1)
        return jnp.einsum("blf,fh->blh", patches.astype(bf16), Wf,
                          preferred_element_type=f32) + sh

    y = conv_bn(x, W1, b1, s1, t1)
    y = jnp.where(y > 0, y, a1 * y)
    z = conv_bn(y, W2, b2, s2, t2)
    z = jnp.where(z > 0, z, a2 * z)
    return jnp.max(z, axis=1)                                   # [B, H]


def _mlp_ref(x, mlp_params):
    W1, b1, s1, t1, W2, b2, s2, t2, W3, b3 = mlp_params
    H = W1.shape[-1]

    def lin_bn_relu(h, W, b, s, t):
        Wf = (W * s.reshape(1, H)).astype(bf16)
        sh = b.reshape(1, H) * s.reshape(1, H) + t.reshape(1, H)
        return jnp.maximum(jnp.dot(h.astype(bf16), Wf,
                                   preferred_element_type=f32) + sh, 0.0)

    h = lin_bn_relu(x, W1, b1, s1, t1)
    h = lin_bn_relu(h, W2, b2, s2, t2)
    return jnp.dot(h.astype(bf16), W3.astype(bf16),
                   preferred_element_type=f32) + b3


def _textcnn_ref(x, branch_params, kernels, mlp_params):
    feats = [_branch_ref(x, k, prm) for k, prm in zip(kernels, branch_params)]
    return _mlp_ref(jnp.concatenate(feats, axis=1), mlp_params)


# ----------------------------------------------------------------------------
# Deterministic parameter init (conv weights in [k, Cin, Cout] layout; a real
# torch import must transpose Conv1d's [Cout, Cin, k]).
# ----------------------------------------------------------------------------
def _bn_fold(key, H):
    k1, k2, k3, k4 = jax.random.split(key, 4)
    gamma = 1.0 + 0.1 * jax.random.normal(k1, (1, H), f32)
    beta = 0.1 * jax.random.normal(k2, (1, H), f32)
    mean = 0.1 * jax.random.normal(k3, (1, H), f32)
    var = jax.random.uniform(k4, (1, H), f32, minval=0.5, maxval=1.5)
    scale = gamma / jnp.sqrt(var + 1e-5)
    shift = beta - mean * scale
    return scale, shift


def _init_branch(key, E, H, k):
    ks = jax.random.split(key, 6)
    W1 = 0.1 * jax.random.normal(ks[0], (k, E, H), f32)
    b1 = 0.1 * jax.random.normal(ks[1], (1, H), f32)
    s1, t1 = _bn_fold(ks[2], H)
    a1 = jnp.full((1, H), 0.25, f32)     # PReLU (0.25 == torch shared default at init)
    W2 = 0.1 * jax.random.normal(ks[3], (k, H, H), f32)
    b2 = 0.1 * jax.random.normal(ks[4], (1, H), f32)
    s2, t2 = _bn_fold(ks[5], H)
    a2 = jnp.full((1, H), 0.25, f32)
    return (W1, b1, s1, t1, a1, W2, b2, s2, t2, a2)


def _init_mlp(key, H, n_branch):
    ks = jax.random.split(key, 8)
    W1 = 0.1 * jax.random.normal(ks[0], (H * n_branch, H), f32)
    b1 = 0.1 * jax.random.normal(ks[1], (1, H), f32)
    s1, t1 = _bn_fold(ks[2], H)
    W2 = 0.1 * jax.random.normal(ks[3], (H, H), f32)
    b2 = 0.1 * jax.random.normal(ks[4], (1, H), f32)
    s2, t2 = _bn_fold(ks[5], H)
    W3 = 0.1 * jax.random.normal(ks[6], (H, H), f32)
    b3 = 0.1 * jax.random.normal(ks[7], (1, H), f32)
    return (W1, b1, s1, t1, W2, b2, s2, t2, W3, b3)


# ----------------------------------------------------------------------------
if __name__ == "__main__":
    B, L, E, H = 2, 16, 32, 32
    kernels = (3, 5, 7)

    root = jax.random.PRNGKey(0)
    kx, kb1, kb2, kb3, km = jax.random.split(root, 5)
    protein = jax.random.normal(kx, (B, L, E), f32)     # [batch, seq, embed]

    branch_params = [_init_branch(kb1, E, H, kernels[0]),
                     _init_branch(kb2, E, H, kernels[1]),
                     _init_branch(kb3, E, H, kernels[2])]
    mlp_params = _init_mlp(km, H, len(kernels))

    fwd = jax.jit(functools.partial(textcnn_forward, kernels=kernels))
    out = jax.block_until_ready(fwd(protein, branch_params, mlp_params))

    ref = _textcnn_ref(protein, branch_params, kernels, mlp_params)
    assert out.shape == (B, H)
    err = jnp.max(jnp.abs(out - ref))
    assert jnp.allclose(out, ref, atol=2e-3, rtol=2e-3), f"max abs err = {err}"

    print("KERNEL_OK")
</pallas_src>

<mosaic_0001>
module attributes {stable_mosaic.version = 11 : i64} {
  func.func @kernel(%arg0: memref<48x224xbf16, #tpu.memory_space<vmem>>, %arg1: memref<896x96xbf16, #tpu.memory_space<vmem>>, %arg2: memref<160x32xbf16, #tpu.memory_space<vmem>>, %arg3: memref<8x128xf32, #tpu.memory_space<vmem>>, %arg4: memref<2x32xf32, #tpu.memory_space<vmem>>) attributes {dimension_semantics = [], scalar_prefetch = 0 : i64, scratch_operands = 0 : i64, tpu.core_type = #tpu.core_type<tc>} {
    %c0 = arith.constant 0 : index
    %c0_0 = arith.constant 0 : index
    %0 = vector.load %arg0[%c0, %c0_0] : memref<48x224xbf16, #tpu.memory_space<vmem>>, vector<48x224xbf16>
    %c0_1 = arith.constant 0 : index
    %c0_2 = arith.constant 0 : index
    %1 = vector.load %arg1[%c0_1, %c0_2] : memref<896x96xbf16, #tpu.memory_space<vmem>>, vector<224x96xbf16>
    %cst = arith.constant dense<0.000000e+00> : vector<48x96xf32>
    %2 = tpu.matmul %0, %1, %cst {dimension_numbers = #tpu.dot_dimension_numbers<[1], [0], [0], [1], [0, 0, 1, 1], [], []>} : vector<48x224xbf16>, vector<224x96xbf16>, vector<48x96xf32> -> vector<48x96xf32>
    %c0_3 = arith.constant 0 : index
    %c0_4 = arith.constant 0 : index
    %3 = vector.load %arg3[%c0_3, %c0_4] : memref<8x128xf32, #tpu.memory_space<vmem>>, vector<1x96xf32>
    %4 = vector.broadcast %3 : vector<1x96xf32> to vector<48x96xf32>
    %5 = arith.addf %2, %4 : vector<48x96xf32>
    %cst_5 = arith.constant 0.000000e+00 : f32
    %6 = vector.broadcast %cst_5 : f32 to vector<48x96xf32>
    %7 = arith.cmpf ogt, %5, %6 : vector<48x96xf32>
    %c1 = arith.constant 1 : index
    %c0_6 = arith.constant 0 : index
    %8 = vector.load %arg3[%c1, %c0_6] : memref<8x128xf32, #tpu.memory_space<vmem>>, vector<1x96xf32>
    %9 = vector.broadcast %8 : vector<1x96xf32> to vector<48x96xf32>
    %10 = arith.mulf %9, %5 : vector<48x96xf32>
    %11 = arith.select %7, %5, %10 : vector<48x96xi1>, vector<48x96xf32>
    %12 = tpu.iota {dimensions = array<i32: 0>} : vector<48x1xi32>
    %c3_i32 = arith.constant 3 : i32
    %13 = vector.broadcast %c3_i32 : i32 to vector<48x1xi32>
    %14 = arith.cmpi sge, %12, %13 : vector<48x1xi32>
    %c19_i32 = arith.constant 19 : i32
    %15 = vector.broadcast %c19_i32 : i32 to vector<48x1xi32>
    %16 = arith.cmpi slt, %12, %15 : vector<48x1xi32>
    %17 = arith.andi %14, %16 : vector<48x1xi1>
    %c27_i32 = arith.constant 27 : i32
    %18 = vector.broadcast %c27_i32 : i32 to vector<48x1xi32>
    %19 = arith.cmpi sge, %12, %18 : vector<48x1xi32>
    %c43_i32 = arith.constant 43 : i32
    %20 = vector.broadcast %c43_i32 : i32 to vector<48x1xi32>
    %21 = arith.cmpi slt, %12, %20 : vector<48x1xi32>
    %22 = arith.andi %19, %21 : vector<48x1xi1>
    %23 = arith.ori %17, %22 : vector<48x1xi1>
    %cst_7 = arith.constant 0.000000e+00 : f32
    %24 = vector.shape_cast %23 : vector<48x1xi1> to vector<48x1xi1>
    %25 = vector.broadcast %24 : vector<48x1xi1> to vector<48x96xi1>
    %26 = vector.broadcast %cst_7 : f32 to vector<48x96xf32>
    %27 = arith.select %25, %11, %26 : vector<48x96xi1>, vector<48x96xf32>
    %c224 = arith.constant 224 : index
    %c0_8 = arith.constant 0 : index
    %28 = vector.load %arg1[%c224, %c0_8] : memref<896x96xbf16, #tpu.memory_space<vmem>>, vector<96x96xbf16>
    %cst_9 = arith.constant 0.000000e+00 : f32
    %29 = vector.broadcast %cst_9 : f32 to vector<3x96xf32>
    %30 = vector.extract_strided_slice %27 {offsets = [0, 0], sizes = [45, 96], strides = [1, 1]} : vector<48x96xf32> to vector<45x96xf32>
    %31 = tpu.concatenate %29, %30 in 0 : vector<3x96xf32>, vector<45x96xf32> -> vector<48x96xf32>
    %32 = arith.truncf %31 : vector<48x96xf32> to vector<48x96xbf16>
    %cst_10 = arith.constant dense<0.000000e+00> : vector<48x96xf32>
    %33 = tpu.matmul %32, %28, %cst_10 {dimension_numbers = #tpu.dot_dimension_numbers<[1], [0], [0], [1], [0, 0, 1, 1], [], []>} : vector<48x96xbf16>, vector<96x96xbf16>, vector<48x96xf32> -> vector<48x96xf32>
    %c320 = arith.constant 320 : index
    %c0_11 = arith.constant 0 : index
    %34 = vector.load %arg1[%c320, %c0_11] : memref<896x96xbf16, #tpu.memory_space<vmem>>, vector<96x96xbf16>
    %cst_12 = arith.constant 0.000000e+00 : f32
    %35 = vector.broadcast %cst_12 : f32 to vector<2x96xf32>
    %36 = vector.extract_strided_slice %27 {offsets = [0, 0], sizes = [46, 96], strides = [1, 1]} : vector<48x96xf32> to vector<46x96xf32>
    %37 = tpu.concatenate %35, %36 in 0 : vector<2x96xf32>, vector<46x96xf32> -> vector<48x96xf32>
    %38 = arith.truncf %37 : vector<48x96xf32> to vector<48x96xbf16>
    %cst_13 = arith.constant dense<0.000000e+00> : vector<48x96xf32>
    %39 = tpu.matmul %38, %34, %cst_13 {dimension_numbers = #tpu.dot_dimension_numbers<[1], [0], [0], [1], [0, 0, 1, 1], [], []>} : vector<48x96xbf16>, vector<96x96xbf16>, vector<48x96xf32> -> vector<48x96xf32>
    %40 = arith.addf %33, %39 : vector<48x96xf32>
    %c416 = arith.constant 416 : index
    %c0_14 = arith.constant 0 : index
    %41 = vector.load %arg1[%c416, %c0_14] : memref<896x96xbf16, #tpu.memory_space<vmem>>, vector<96x96xbf16>
    %cst_15 = arith.constant 0.000000e+00 : f32
    %42 = vector.broadcast %cst_15 : f32 to vector<1x96xf32>
    %43 = vector.extract_strided_slice %27 {offsets = [0, 0], sizes = [47, 96], strides = [1, 1]} : vector<48x96xf32> to vector<47x96xf32>
    %44 = tpu.concatenate %42, %43 in 0 : vector<1x96xf32>, vector<47x96xf32> -> vector<48x96xf32>
    %45 = arith.truncf %44 : vector<48x96xf32> to vector<48x96xbf16>
    %cst_16 = arith.constant dense<0.000000e+00> : vector<48x96xf32>
    %46 = tpu.matmul %45, %41, %cst_16 {dimension_numbers = #tpu.dot_dimension_numbers<[1], [0], [0], [1], [0, 0, 1, 1], [], []>} : vector<48x96xbf16>, vector<96x96xbf16>, vector<48x96xf32> -> vector<48x96xf32>
    %47 = arith.addf %40, %46 : vector<48x96xf32>
    %c512 = arith.constant 512 : index
    %c0_17 = arith.constant 0 : index
    %48 = vector.load %arg1[%c512, %c0_17] : memref<896x96xbf16, #tpu.memory_space<vmem>>, vector<96x96xbf16>
    %49 = arith.truncf %27 : vector<48x96xf32> to vector<48x96xbf16>
    %cst_18 = arith.constant dense<0.000000e+00> : vector<48x96xf32>
    %50 = tpu.matmul %49, %48, %cst_18 {dimension_numbers = #tpu.dot_dimension_numbers<[1], [0], [0], [1], [0, 0, 1, 1], [], []>} : vector<48x96xbf16>, vector<96x96xbf16>, vector<48x96xf32> -> vector<48x96xf32>
    %51 = arith.addf %47, %50 : vector<48x96xf32>
    %c608 = arith.constant 608 : index
    %c0_19 = arith.constant 0 : index
    %52 = vector.load %arg1[%c608, %c0_19] : memref<896x96xbf16, #tpu.memory_space<vmem>>, vector<96x96xbf16>
    %cst_20 = arith.constant 0.000000e+00 : f32
    %53 = vector.broadcast %cst_20 : f32 to vector<1x96xf32>
    %54 = vector.extract_strided_slice %27 {offsets = [1, 0], sizes = [47, 96], strides = [1, 1]} : vector<48x96xf32> to vector<47x96xf32>
    %55 = tpu.concatenate %54, %53 in 0 : vector<47x96xf32>, vector<1x96xf32> -> vector<48x96xf32>
    %56 = arith.truncf %55 : vector<48x96xf32> to vector<48x96xbf16>
    %cst_21 = arith.constant dense<0.000000e+00> : vector<48x96xf32>
    %57 = tpu.matmul %56, %52, %cst_21 {dimension_numbers = #tpu.dot_dimension_numbers<[1], [0], [0], [1], [0, 0, 1, 1], [], []>} : vector<48x96xbf16>, vector<96x96xbf16>, vector<48x96xf32> -> vector<48x96xf32>
    %58 = arith.addf %51, %57 : vector<48x96xf32>
    %c704 = arith.constant 704 : index
    %c0_22 = arith.constant 0 : index
    %59 = vector.load %arg1[%c704, %c0_22] : memref<896x96xbf16, #tpu.memory_space<vmem>>, vector<96x96xbf16>
    %cst_23 = arith.constant 0.000000e+00 : f32
    %60 = vector.broadcast %cst_23 : f32 to vector<2x96xf32>
    %61 = vector.extract_strided_slice %27 {offsets = [2, 0], sizes = [46, 96], strides = [1, 1]} : vector<48x96xf32> to vector<46x96xf32>
    %62 = tpu.concatenate %61, %60 in 0 : vector<46x96xf32>, vector<2x96xf32> -> vector<48x96xf32>
    %63 = arith.truncf %62 : vector<48x96xf32> to vector<48x96xbf16>
    %cst_24 = arith.constant dense<0.000000e+00> : vector<48x96xf32>
    %64 = tpu.matmul %63, %59, %cst_24 {dimension_numbers = #tpu.dot_dimension_numbers<[1], [0], [0], [1], [0, 0, 1, 1], [], []>} : vector<48x96xbf16>, vector<96x96xbf16>, vector<48x96xf32> -> vector<48x96xf32>
    %65 = arith.addf %58, %64 : vector<48x96xf32>
    %c800 = arith.constant 800 : index
    %c0_25 = arith.constant 0 : index
    %66 = vector.load %arg1[%c800, %c0_25] : memref<896x96xbf16, #tpu.memory_space<vmem>>, vector<96x96xbf16>
    %cst_26 = arith.constant 0.000000e+00 : f32
    %67 = vector.broadcast %cst_26 : f32 to vector<3x96xf32>
    %68 = vector.extract_strided_slice %27 {offsets = [3, 0], sizes = [45, 96], strides = [1, 1]} : vector<48x96xf32> to vector<45x96xf32>
    %69 = tpu.concatenate %68, %67 in 0 : vector<45x96xf32>, vector<3x96xf32> -> vector<48x96xf32>
    %70 = arith.truncf %69 : vector<48x96xf32> to vector<48x96xbf16>
    %cst_27 = arith.constant dense<0.000000e+00> : vector<48x96xf32>
    %71 = tpu.matmul %70, %66, %cst_27 {dimension_numbers = #tpu.dot_dimension_numbers<[1], [0], [0], [1], [0, 0, 1, 1], [], []>} : vector<48x96xbf16>, vector<96x96xbf16>, vector<48x96xf32> -> vector<48x96xf32>
    %72 = arith.addf %65, %71 : vector<48x96xf32>
    %c2 = arith.constant 2 : index
    %c0_28 = arith.constant 0 : index
    %73 = vector.load %arg3[%c2, %c0_28] : memref<8x128xf32, #tpu.memory_space<vmem>>, vector<1x96xf32>
    %74 = vector.broadcast %73 : vector<1x96xf32> to vector<48x96xf32>
    %75 = arith.addf %72, %74 : vector<48x96xf32>
    %cst_29 = arith.constant 0.000000e+00 : f32
    %76 = vector.broadcast %cst_29 : f32 to vector<48x96xf32>
    %77 = arith.cmpf ogt, %75, %76 : vector<48x96xf32>
    %c3 = arith.constant 3 : index
    %c0_30 = arith.constant 0 : index
    %78 = vector.load %arg3[%c3, %c0_30] : memref<8x128xf32, #tpu.memory_space<vmem>>, vector<1x96xf32>
    %79 = vector.broadcast %78 : vector<1x96xf32> to vector<48x96xf32>
    %80 = arith.mulf %79, %75 : vector<48x96xf32>
    %81 = arith.select %77, %75, %80 : vector<48x96xi1>, vector<48x96xf32>
    %82 = vector.extract_strided_slice %81 {offsets = [3, 0], sizes = [16, 96], strides = [1, 1]} : vector<48x96xf32> to vector<16x96xf32>
    %cst_31 = arith.constant dense<0xFF800000> : vector<96xf32>
    %83 = vector.multi_reduction <maximumf>, %82, %cst_31 [0] : vector<16x96xf32> to vector<96xf32>
    %84 = vector.shape_cast %83 : vector<96xf32> to vector<1x96xf32>
    %85 = vector.extract_strided_slice %81 {offsets = [27, 0], sizes = [16, 96], strides = [1, 1]} : vector<48x96xf32> to vector<16x96xf32>
    %cst_32 = arith.constant dense<0xFF800000> : vector<96xf32>
    %86 = vector.multi_reduction <maximumf>, %85, %cst_32 [0] : vector<16x96xf32> to vector<96xf32>
    %87 = vector.shape_cast %86 : vector<96xf32> to vector<1x96xf32>
    %88 = tpu.concatenate %84, %87 in 0 : vector<1x96xf32>, vector<1x96xf32> -> vector<2x96xf32>
    %89 = arith.truncf %88 : vector<2x96xf32> to vector<2x96xbf16>
    %c0_33 = arith.constant 0 : index
    %c0_34 = arith.constant 0 : index
    %90 = vector.load %arg2[%c0_33, %c0_34] : memref<160x32xbf16, #tpu.memory_space<vmem>>, vector<96x32xbf16>
    %cst_35 = arith.constant dense<0.000000e+00> : vector<2x32xf32>
    %91 = tpu.matmul %89, %90, %cst_35 {dimension_numbers = #tpu.dot_dimension_numbers<[1], [0], [0], [1], [0, 0, 1, 1], [], []>} : vector<2x96xbf16>, vector<96x32xbf16>, vector<2x32xf32> -> vector<2x32xf32>
    %c4 = arith.constant 4 : index
    %c0_36 = arith.constant 0 : index
    %92 = vector.load %arg3[%c4, %c0_36] : memref<8x128xf32, #tpu.memory_space<vmem>>, vector<1x32xf32>
    %93 = vector.broadcast %92 : vector<1x32xf32> to vector<2x32xf32>
    %94 = arith.addf %91, %93 : vector<2x32xf32>
    %cst_37 = arith.constant 0.000000e+00 : f32
    %95 = vector.broadcast %cst_37 : f32 to vector<2x32xf32>
    %96 = arith.maximumf %94, %95 : vector<2x32xf32>
    %97 = arith.truncf %96 : vector<2x32xf32> to vector<2x32xbf16>
    %c96 = arith.constant 96 : index
    %c0_38 = arith.constant 0 : index
    %98 = vector.load %arg2[%c96, %c0_38] : memref<160x32xbf16, #tpu.memory_space<vmem>>, vector<32x32xbf16>
    %cst_39 = arith.constant dense<0.000000e+00> : vector<2x32xf32>
    %99 = tpu.matmul %97, %98, %cst_39 {dimension_numbers = #tpu.dot_dimension_numbers<[1], [0], [0], [1], [0, 0, 1, 1], [], []>} : vector<2x32xbf16>, vector<32x32xbf16>, vector<2x32xf32> -> vector<2x32xf32>
    %c5 = arith.constant 5 : index
    %c0_40 = arith.constant 0 : index
    %100 = vector.load %arg3[%c5, %c0_40] : memref<8x128xf32, #tpu.memory_space<vmem>>, vector<1x32xf32>
    %101 = vector.broadcast %100 : vector<1x32xf32> to vector<2x32xf32>
    %102 = arith.addf %99, %101 : vector<2x32xf32>
    %cst_41 = arith.constant 0.000000e+00 : f32
    %103 = vector.broadcast %cst_41 : f32 to vector<2x32xf32>
    %104 = arith.maximumf %102, %103 : vector<2x32xf32>
    %105 = arith.truncf %104 : vector<2x32xf32> to vector<2x32xbf16>
    %c128 = arith.constant 128 : index
    %c0_42 = arith.constant 0 : index
    %106 = vector.load %arg2[%c128, %c0_42] : memref<160x32xbf16, #tpu.memory_space<vmem>>, vector<32x32xbf16>
    %cst_43 = arith.constant dense<0.000000e+00> : vector<2x32xf32>
    %107 = tpu.matmul %105, %106, %cst_43 {dimension_numbers = #tpu.dot_dimension_numbers<[1], [0], [0], [1], [0, 0, 1, 1], [], []>} : vector<2x32xbf16>, vector<32x32xbf16>, vector<2x32xf32> -> vector<2x32xf32>
    %c6 = arith.constant 6 : index
    %c0_44 = arith.constant 0 : index
    %108 = vector.load %arg3[%c6, %c0_44] : memref<8x128xf32, #tpu.memory_space<vmem>>, vector<1x32xf32>
    %109 = vector.broadcast %108 : vector<1x32xf32> to vector<2x32xf32>
    %110 = arith.addf %107, %109 : vector<2x32xf32>
    %c0_45 = arith.constant 0 : index
    %c0_46 = arith.constant 0 : index
    %111 = vector.load %arg4[%c0_45, %c0_46] : memref<2x32xf32, #tpu.memory_space<vmem>>, vector<2x32xf32>
    tpu.vector_store %arg4[%c0_45, %c0_46], %110 {strides = array<i32>} : memref<2x32xf32, #tpu.memory_space<vmem>>, vector<2x32xf32>,
    return
  }
}

</mosaic_0001>

<llo_original>
// kernel: textcnn_forward.1
$region0: #{textcnn_forward.1}
  #allocation0 [shape = 'u32[]', space=smem, size = 0x4, offset = 0x4, fixed_abs, tag = 'smem constant byte address 0x4 - core index']
  #allocation1 [shape = 'u32[144,128]{1,0:T(1,128)}', space=vmem, size = 0x12000, scoped, tag = 'internal scratch']
  %s0 = inlined_call_operand.vmem [shape: bf16[48,224], index: 0, kind: input, shape index: {}]
  %s1 = inlined_call_operand.vmem [shape: bf16[896,96], index: 1, kind: input, shape index: {}]
  %s2 = inlined_call_operand.vmem [shape: bf16[160,32], index: 2, kind: input, shape index: {}]
  %s3 = inlined_call_operand.vmem [shape: f32[8,128], index: 3, kind: input, shape index: {}]
  %s4 = inlined_call_operand.hbm [shape: f32[2,32], index: 4, kind: output, shape index: {}]
  %s5 = sld [smem:[#allocation0]]
  $region26: #{textcnn_forward.1} parent=0
    _
  %s7 = ssub.s32 1, %s5
  %s8 = scalar_select 0, %s7, %s5
  $region1: #{textcnn_forward.1} parent=0
    #allocation2 [shape = 'u8[1024]{0}', space=vmem, size = 0x400, scoped, tag = 'output window, operand 0, single buffered']
    #allocation3 [shape = 's32[1]{0}', space=sflag, size = 0x4, scoped, tag = 'scoped memory for textcnn_forward.1']
    %9 = vsyncpa [#allocation3], 0
    // Predicated region
    $region2: #{textcnn_forward.1} parent=1 // pred_check
      _
    $region3: #{textcnn_forward.1} parent=1 // pred_check_branch
      %11 = sbr.rel (0) target = $region5
    $region4: #{textcnn_forward.1} parent=1 // pred_region
      _
    $region5: #{textcnn_forward.1} parent=1 // pred_fallthru
      _
    // Predicated region
    $region6: #{textcnn_forward.1} parent=1 // pred_check
      _
    $region7: #{textcnn_forward.1} parent=1 // pred_check_branch
      %13 = sbr.rel (0) target = $region9
    $region8: #{textcnn_forward.1} parent=1 // pred_region
      _
    $region9: #{textcnn_forward.1} parent=1 // pred_fallthru
      _
    // Predicated region
    $region10: #{textcnn_forward.1} parent=1 // pred_check
      _
    $region11: #{textcnn_forward.1} parent=1 // pred_check_branch
      %15 = sbr.rel (0) target = $region13
    $region12: #{textcnn_forward.1} parent=1 // pred_region
      _
    $region13: #{textcnn_forward.1} parent=1 // pred_fallthru
      _
    // Predicated region
    $region14: #{textcnn_forward.1} parent=1 // pred_check
      _
    $region15: #{textcnn_forward.1} parent=1 // pred_check_branch
      %17 = sbr.rel (0) target = $region17
    $region16: #{textcnn_forward.1} parent=1 // pred_region
      _
    $region17: #{textcnn_forward.1} parent=1 // pred_fallthru
      _
    %v19 = vld [vmem:[%s0] sm:$0xff]
    %v20 = vld [vmem:[%s0 + $0x8] sm:$0xff]
    %v21 = vld [vmem:[%s0 + $0x10] sm:$0xff]
    %v22 = vld [vmem:[%s0 + $0x18] sm:$0xff]
    %v23 = vld [vmem:[%s0 + $0x20] sm:$0xff]
    %v24 = vld [vmem:[%s0 + $0x28] sm:$0xff]
    %v25 = vld [vmem:[%s1] sm:$0xf]
    %v26 = vld [vmem:[%s1 + $0x4] sm:$0xf]
    %v27 = vld [vmem:[%s1 + $0x8] sm:$0xf]
    %v28 = vld [vmem:[%s1 + $0xc] sm:$0xf]
    %v29 = vld [vmem:[%s1 + $0x10] sm:$0xf]
    %v30 = vld [vmem:[%s1 + $0x14] sm:$0xf]
    %v31 = vld [vmem:[%s1 + $0x18] sm:$0xf]
    %v32 = vld [vmem:[%s1 + $0x1c] sm:$0xf]
    %v33 = vld [vmem:[%s1 + $0x20] sm:$0xf]
    %v34 = vld [vmem:[%s1 + $0x24] sm:$0xf]
    %v35 = vld [vmem:[%s1 + $0x28] sm:$0xf]
    %v36 = vld [vmem:[%s1 + $0x2c] sm:$0xf]
    %v37 = vld [vmem:[%s1 + $0x30] sm:$0xf]
    %v38 = vld [vmem:[%s1 + $0x34] sm:$0xf]
    %v39 = vld [vmem:[%s1 + $0x38] sm:$0xf]
    %v40 = vld [vmem:[%s1 + $0x3c] sm:$0xf]
    %v41 = vld [vmem:[%s1 + $0x40] sm:$0xf]
    %v42 = vld [vmem:[%s1 + $0x44] sm:$0xf]
    %v43 = vld [vmem:[%s1 + $0x48] sm:$0xf]
    %v44 = vld [vmem:[%s1 + $0x4c] sm:$0xf]
    %v45 = vld [vmem:[%s1 + $0x50] sm:$0xf]
    %v46 = vld [vmem:[%s1 + $0x54] sm:$0xf]
    %v47 = vld [vmem:[%s1 + $0x58] sm:$0xf]
    %v48 = vld [vmem:[%s1 + $0x5c] sm:$0xf]
    %v49 = vld [vmem:[%s1 + $0x60] sm:$0xf]
    %v50 = vld [vmem:[%s1 + $0x64] sm:$0xf]
    %v51 = vld [vmem:[%s1 + $0x68] sm:$0xf]
    %v52 = vld [vmem:[%s1 + $0x6c] sm:$0xf]
    %v53 = vld [vmem:[%s3] sm:$0x1]
    %v54 = vlaneseq
    %v55 = vshrl.u32 %v54, 7
    %v56 = vsub.s32 0, %v55
    %v57 = vrot.slane %v53, %v56
    %v64 = vunpack.c.l.b16 %v19
    %v65 = vunpack.c.h.b16 %v19
    %v66 = vunpack.c.l.b16 %v20
    %v67 = vunpack.c.h.b16 %v20
    %v68 = vunpack.c.l.b16 %v21
    %v69 = vunpack.c.h.b16 %v21
    %v70 = vunpack.c.l.b16 %v22
    %v71 = vunpack.c.h.b16 %v22
    %v72 = vunpack.c.l.b16 %v23
    %v73 = vunpack.c.h.b16 %v23
    %v74 = vunpack.c.l.b16 %v24
    %v75 = vunpack.c.h.b16 %v24
    %v76 = vpack.c.b16 %v66, %v64
    %v77 = vpack.c.b16 %v67, %v65
    %v78 = vpack.c.b16 %v70, %v68
    %v79 = vpack.c.b16 %v71, %v69
    %v80 = vpack.c.b16 %v74, %v72
    %v81 = vpack.c.b16 %v75, %v73
    %v113 = vunpack.c.l.b16 %v25
    %v114 = vunpack.c.l.b16 %v26
    %v115 = vunpack.c.l.b16 %v27
    %v116 = vunpack.c.l.b16 %v28
    %v117 = vunpack.c.l.b16 %v29
    %v118 = vunpack.c.l.b16 %v30
    %v119 = vunpack.c.l.b16 %v31
    %v120 = vunpack.c.l.b16 %v32
    %v121 = vunpack.c.l.b16 %v33
    %v122 = vunpack.c.l.b16 %v34
    %v123 = vunpack.c.l.b16 %v35
    %v124 = vunpack.c.l.b16 %v36
    %v125 = vunpack.c.l.b16 %v37
    %v126 = vunpack.c.l.b16 %v38
    %v127 = vunpack.c.l.b16 %v39
    %v128 = vunpack.c.l.b16 %v40
    %v129 = vunpack.c.l.b16 %v41
    %v130 = vunpack.c.l.b16 %v42
    %v131 = vunpack.c.l.b16 %v43
    %v132 = vunpack.c.l.b16 %v44
    %v133 = vunpack.c.l.b16 %v45
    %v134 = vunpack.c.l.b16 %v46
    %v135 = vunpack.c.l.b16 %v47
    %v136 = vunpack.c.l.b16 %v48
    %v137 = vunpack.c.l.b16 %v49
    %v138 = vunpack.c.l.b16 %v50
    %v139 = vunpack.c.l.b16 %v51
    %v140 = vunpack.c.l.b16 %v52
    %v141 = vpack.c.b16 %v114, %v113
    %v142 = vpack.c.b16 %v116, %v115
    %v143 = vpack.c.b16 %v118, %v117
    %v144 = vpack.c.b16 %v120, %v119
    %v145 = vpack.c.b16 %v122, %v121
    %v146 = vpack.c.b16 %v124, %v123
    %v147 = vpack.c.b16 %v126, %v125
    %v148 = vpack.c.b16 %v128, %v127
    %v149 = vpack.c.b16 %v130, %v129
    %v150 = vpack.c.b16 %v132, %v131
    %v151 = vpack.c.b16 %v134, %v133
    %v152 = vpack.c.b16 %v136, %v135
    %v153 = vpack.c.b16 %v138, %v137
    %v154 = vpack.c.b16 %v140, %v139
    %vm169 = vcmask 785408
    %v171 = vsel %vm169, %v77, 0
    %v174 = vsel %vm169, %v79, 0
    %v177 = vsel %vm169, %v81, 0
    %179 = vmatprep.subr.bf16.mxu0 0
    %180 = vmatpush1.bf16.msra.mxu0 %v148
    %181 = vmatprep.subr.bf16.mxu0 0
    %182 = vmatpush1.bf16.msra.mxu0 %v147
    %183 = vmatprep.subr.bf16.mxu0 0
    %184 = vmatpush1.bf16.msra.mxu0 %v146
    %185 = vmatprep.subr.bf16.mxu0 0
    %186 = vmatpush1.bf16.msra.mxu0 %v145
    %187 = vmatprep.subr.bf16.mxu0 0
    %188 = vmatpush1.bf16.msra.mxu0 %v144
    %189 = vmatprep.subr.bf16.mxu0 0
    %190 = vmatpush1.bf16.msra.mxu0 %v143
    %191 = vmatprep.subr.bf16.mxu0 0
    %192 = vmatpush1.bf16.msra.mxu0 %v142
    %193 = vmatprep.subr.bf16.mxu0 0
    %194 = vmatpush1.bf16.msra.mxu0 %v141
    %195 = vmatprep.subr.bf16.mxu0 0
    %196 = vmatpush2.bf16.msra.mxu0 0
    %197 = vmatprep.subr.bf16.mxu0 0
    %198 = vmatpush2.bf16.msra.mxu0 0
    %199 = vmatprep.subr.bf16.mxu0 0
    %200 = vmatpush2.bf16.msra.mxu0 %v154
    %201 = vmatprep.subr.bf16.mxu0 0
    %202 = vmatpush2.bf16.msra.mxu0 %v153
    %203 = vmatprep.subr.bf16.mxu0 0
    %204 = vmatpush2.bf16.msra.mxu0 %v152
    %205 = vmatprep.subr.bf16.mxu0 0
    %206 = vmatpush2.bf16.msra.mxu0 %v151
    %207 = vmatprep.subr.bf16.mxu0 0
    %208 = vmatpush2.bf16.msra.mxu0 %v150
    %209 = vmatprep.subr.bf16.mxu0 0
    %210 = vmatpush2.bf16.msra.mxu0 %v149
    %211 = vmatprep.mubr.bf16.mxu0 %v171
    %212 = vmatmul.mubr.bf16.gmra.mxu0 %v76
    %v213 = vpop.f32.mrf.mxu0
    %v214 = vadd.f32 %v57, %v213
    %v215 = vpop.f32.mrf.mxu0
    %v216 = vpop.f32.mrf.mxu0
    %v217 = vadd.f32 %v57, %v216
    %v218 = vpop.f32.mrf.mxu0
    %219 = vmatprep.mubr.bf16.mxu0 %v174
    %220 = vmatmul.mubr.bf16.gmra.mxu0 %v78
    %v221 = vpop.f32.mrf.mxu0
    %v222 = vadd.f32 %v57, %v221
    %v223 = vpop.f32.mrf.mxu0
    %v224 = vpop.f32.mrf.mxu0
    %v225 = vadd.f32 %v57, %v224
    %v226 = vpop.f32.mrf.mxu0
    %227 = vmatprep.mubr.bf16.mxu0 %v177
    %228 = vmatmul.mubr.bf16.gmra.mxu0 %v80
    %v229 = vpop.f32.mrf.mxu0
    %v230 = vadd.f32 %v57, %v229
    %v231 = vpop.f32.mrf.mxu0
    %v232 = vpop.f32.mrf.mxu0
    %v233 = vadd.f32 %v57, %v232
    %v234 = vpop.f32.mrf.mxu0
    %235 = vdwg.mxu0
    %vm236 = vcmp.gt.f32.partialorder %v214, 0.0
    %vm237 = vcmp.gt.f32.partialorder %v217, 0.0
    %vm238 = vcmp.gt.f32.partialorder %v222, 0.0
    %vm239 = vcmp.gt.f32.partialorder %v225, 0.0
    %vm240 = vcmp.gt.f32.partialorder %v230, 0.0
    %vm241 = vcmp.gt.f32.partialorder %v233, 0.0
    %v242 = vld [vmem:[%s3 + $0x1] sm:$0x1]
    %v243 = vlaneseq
    %v244 = vshrl.u32 %v243, 7
    %v245 = vsub.s32 0, %v244
    %v246 = vrot.slane %v242, %v245
    %v247 = vmul.f32 %v246, %v214
    %v248 = vmul.f32 %v246, %v217
    %v249 = vmul.f32 %v246, %v222
    %v250 = vmul.f32 %v246, %v225
    %v251 = vmul.f32 %v246, %v230
    %v252 = vmul.f32 %v246, %v233
    %v253 = vsel %vm236, %v214, %v247
    %v254 = vsel %vm237, %v217, %v248
    %v255 = vsel %vm238, %v222, %v249
    %v256 = vsel %vm239, %v225, %v250
    %v257 = vsel %vm240, %v230, %v251
    %v258 = vsel %vm241, %v233, %v252
    %v259 = vlaneseq
    %v260 = vshrl.u32 %v259, 7
    %v261 = vadd.s32 %v260, 8
    %v262 = vadd.s32 %v260, 16
    %v263 = vadd.s32 %v260, 24
    %v264 = vadd.s32 %v260, 32
    %v265 = vadd.s32 %v260, 40
    %vm266 = vcmp.ge.s32.totalorder %v260, 3
    %vm267 = vcmp.ge.s32.totalorder %v261, 3
    %vm268 = vcmp.ge.s32.totalorder %v262, 3
    %vm269 = vcmp.ge.s32.totalorder %v263, 3
    %vm270 = vcmp.ge.s32.totalorder %v264, 3
    %vm271 = vcmp.ge.s32.totalorder %v265, 3
    %vm272 = vcmp.lt.s32.totalorder %v260, 19
    %vm273 = vcmp.lt.s32.totalorder %v261, 19
    %vm274 = vcmp.lt.s32.totalorder %v262, 19
    %vm275 = vcmp.lt.s32.totalorder %v263, 19
    %vm276 = vcmp.lt.s32.totalorder %v264, 19
    %vm277 = vcmp.lt.s32.totalorder %v265, 19
    %vm278 = vmand %vm266, %vm272
    %vm279 = vmand %vm267, %vm273
    %vm280 = vmand %vm268, %vm274
    %vm281 = vmand %vm269, %vm275
    %vm282 = vmand %vm270, %vm276
    %vm283 = vmand %vm271, %vm277
    %vm284 = vcmp.ge.s32.totalorder %v260, 27
    %vm285 = vcmp.ge.s32.totalorder %v261, 27
    %vm286 = vcmp.ge.s32.totalorder %v262, 27
    %vm287 = vcmp.ge.s32.totalorder %v263, 27
    %vm288 = vcmp.ge.s32.totalorder %v264, 27
    %vm289 = vcmp.ge.s32.totalorder %v265, 27
    %vm290 = vcmp.lt.s32.totalorder %v260, 43
    %vm291 = vcmp.lt.s32.totalorder %v261, 43
    %vm292 = vcmp.lt.s32.totalorder %v262, 43
    %vm293 = vcmp.lt.s32.totalorder %v263, 43
    %vm294 = vcmp.lt.s32.totalorder %v264, 43
    %vm295 = vcmp.lt.s32.totalorder %v265, 43
    %vm296 = vmand %vm284, %vm290
    %vm297 = vmand %vm285, %vm291
    %vm298 = vmand %vm286, %vm292
    %vm299 = vmand %vm287, %vm293
    %vm300 = vmand %vm288, %vm294
    %vm301 = vmand %vm289, %vm295
    %vm302 = vmor %vm278, %vm296
    %vm303 = vmor %vm279, %vm297
    %vm304 = vmor %vm280, %vm298
    %vm305 = vmor %vm281, %vm299
    %vm306 = vmor %vm282, %vm300
    %vm307 = vmor %vm283, %vm301
    %v308 = vsel %vm302, 1, 0
    %v309 = vsel %vm303, 1, 0
    %v310 = vsel %vm304, 1, 0
    %v311 = vsel %vm305, 1, 0
    %v312 = vsel %vm306, 1, 0
    %v313 = vsel %vm307, 1, 0
    %vm314 = vcmp.eq.s32.totalorder %v308, 1
    %vm315 = vcmp.eq.s32.totalorder %v309, 1
    %vm316 = vcmp.eq.s32.totalorder %v310, 1
    %vm317 = vcmp.eq.s32.totalorder %v311, 1
    %vm318 = vcmp.eq.s32.totalorder %v312, 1
    %vm319 = vcmp.eq.s32.totalorder %v313, 1
    %v320 = vsel %vm314, %v253, 0.0
    %v321 = vsel %vm315, %v254, 0.0
    %v322 = vsel %vm316, %v255, 0.0
    %v323 = vsel %vm317, %v256, 0.0
    %v324 = vsel %vm318, %v257, 0.0
    %v325 = vsel %vm319, %v258, 0.0
    %v326 = vld [vmem:[%s1 + $0x70] sm:$0xf]
    %v327 = vld [vmem:[%s1 + $0x74] sm:$0xf]
    %v328 = vld [vmem:[%s1 + $0x78] sm:$0xf]
    %v329 = vld [vmem:[%s1 + $0x7c] sm:$0xf]
    %v330 = vld [vmem:[%s1 + $0x80] sm:$0xf]
    %v331 = vld [vmem:[%s1 + $0x84] sm:$0xf]
    %v332 = vld [vmem:[%s1 + $0x88] sm:$0xf]
    %v333 = vld [vmem:[%s1 + $0x8c] sm:$0xf]
    %v334 = vld [vmem:[%s1 + $0x90] sm:$0xf]
    %v335 = vld [vmem:[%s1 + $0x94] sm:$0xf]
    %v336 = vld [vmem:[%s1 + $0x98] sm:$0xf]
    %v337 = vld [vmem:[%s1 + $0x9c] sm:$0xf]
    %vm344 = vcmask 1042432
    %v345 = vrot.slane %v320, 5
    %v346 = vrot.slane %v321, 5
    %v347 = vsel %vm344, %v345, %v346
    %v348 = vrot.slane %v322, 5
    %v349 = vsel %vm344, %v346, %v348
    %v350 = vrot.slane %v323, 5
    %v351 = vsel %vm344, %v348, %v350
    %v352 = vrot.slane %v324, 5
    %v353 = vsel %vm344, %v350, %v352
    %v354 = vrot.slane %v325, 5
    %v355 = vsel %vm344, %v352, %v354
    %v362 = vsel %vm344, 0.0, %v345
    %v363 = vpack.c.bf16 %v347, %v362
    %v364 = vpack.c.bf16 %v351, %v349
    %v365 = vpack.c.bf16 %v355, %v353
    %v366 = vld [vmem:[%s1 + $0xa0] sm:$0xf]
    %v367 = vld [vmem:[%s1 + $0xa4] sm:$0xf]
    %v368 = vld [vmem:[%s1 + $0xa8] sm:$0xf]
    %v369 = vld [vmem:[%s1 + $0xac] sm:$0xf]
    %v370 = vld [vmem:[%s1 + $0xb0] sm:$0xf]
    %v371 = vld [vmem:[%s1 + $0xb4] sm:$0xf]
    %v372 = vld [vmem:[%s1 + $0xb8] sm:$0xf]
    %v373 = vld [vmem:[%s1 + $0xbc] sm:$0xf]
    %v374 = vld [vmem:[%s1 + $0xc0] sm:$0xf]
    %v375 = vld [vmem:[%s1 + $0xc4] sm:$0xf]
    %v376 = vld [vmem:[%s1 + $0xc8] sm:$0xf]
    %v377 = vld [vmem:[%s1 + $0xcc] sm:$0xf]
    %vm378 = vcmask 1041408
    %v379 = vrot.slane %v320, 6
    %v380 = vrot.slane %v321, 6
    %v381 = vsel %vm378, %v379, %v380
    %v382 = vrot.slane %v322, 6
    %v383 = vsel %vm378, %v380, %v382
    %v384 = vrot.slane %v323, 6
    %v385 = vsel %vm378, %v382, %v384
    %v386 = vrot.slane %v324, 6
    %v387 = vsel %vm378, %v384, %v386
    %v388 = vrot.slane %v325, 6
    %v389 = vsel %vm378, %v386, %v388
    %v396 = vsel %vm378, 0.0, %v379
    %v397 = vpack.c.bf16 %v381, %v396
    %v398 = vpack.c.bf16 %v385, %v383
    %v399 = vpack.c.bf16 %v389, %v387
    %v412 = vunpack.c.l.b16 %v366
    %v413 = vunpack.c.l.b16 %v367
    %v414 = vunpack.c.l.b16 %v368
    %v415 = vunpack.c.l.b16 %v369
    %v416 = vunpack.c.l.b16 %v370
    %v417 = vunpack.c.l.b16 %v371
    %v418 = vunpack.c.l.b16 %v372
    %v419 = vunpack.c.l.b16 %v373
    %v420 = vunpack.c.l.b16 %v374
    %v421 = vunpack.c.l.b16 %v375
    %v422 = vunpack.c.l.b16 %v376
    %v423 = vunpack.c.l.b16 %v377
    %v424 = vpack.c.b16 %v413, %v412
    %v425 = vpack.c.b16 %v415, %v414
    %v426 = vpack.c.b16 %v417, %v416
    %v427 = vpack.c.b16 %v419, %v418
    %v428 = vpack.c.b16 %v421, %v420
    %v429 = vpack.c.b16 %v423, %v422
    %v437 = vsel %vm169, %v397, 0
    %v440 = vsel %vm169, %v398, 0
    %v443 = vsel %vm169, %v399, 0
    %445 = vmatprep.subr.bf16.mxu0 0
    %446 = vmatpush1.bf16.msra.mxu0 0
    %447 = vmatprep.subr.bf16.mxu0 0
    %448 = vmatpush1.bf16.msra.mxu0 0
    %449 = vmatprep.subr.bf16.mxu0 0
    %450 = vmatpush1.bf16.msra.mxu0 %v429
    %451 = vmatprep.subr.bf16.mxu0 0
    %452 = vmatpush1.bf16.msra.mxu0 %v428
    %453 = vmatprep.subr.bf16.mxu0 0
    %454 = vmatpush1.bf16.msra.mxu0 %v427
    %455 = vmatprep.subr.bf16.mxu0 0
    %456 = vmatpush1.bf16.msra.mxu0 %v426
    %457 = vmatprep.subr.bf16.mxu0 0
    %458 = vmatpush1.bf16.msra.mxu0 %v425
    %459 = vmatprep.subr.bf16.mxu0 0
    %460 = vmatpush1.bf16.msra.mxu0 %v424
    %461 = vmatprep.subr.bf16.mxu0 0
    %462 = vmatpush2.bf16.msra.mxu0 0
    %463 = vmatprep.subr.bf16.mxu0 0
    %464 = vmatpush2.bf16.msra.mxu0 0
    %465 = vmatprep.subr.bf16.mxu0 0
    %466 = vmatpush2.bf16.msra.mxu0 0
    %467 = vmatprep.subr.bf16.mxu0 0
    %468 = vmatpush2.bf16.msra.mxu0 0
    %469 = vmatprep.subr.bf16.mxu0 0
    %470 = vmatpush2.bf16.msra.mxu0 0
    %471 = vmatprep.subr.bf16.mxu0 0
    %472 = vmatpush2.bf16.msra.mxu0 0
    %473 = vmatprep.subr.bf16.mxu0 0
    %474 = vmatpush2.bf16.msra.mxu0 0
    %475 = vmatprep.subr.bf16.mxu0 0
    %476 = vmatpush2.bf16.msra.mxu0 0
    %477 = vmatprep.mubr.bf16.mxu0 0
    %478 = vmatmul.mubr.bf16.gmra.mxu0 %v437
    %v479 = vpop.f32.mrf.mxu0
    %v480 = vadd.f32 0.0, %v479
    %v481 = vpop.f32.mrf.mxu0
    %v482 = vpop.f32.mrf.mxu0
    %v483 = vadd.f32 0.0, %v482
    %v484 = vpop.f32.mrf.mxu0
    %485 = vmatprep.mubr.bf16.mxu0 0
    %486 = vmatmul.mubr.bf16.gmra.mxu0 %v440
    %v487 = vpop.f32.mrf.mxu0
    %v488 = vadd.f32 0.0, %v487
    %v489 = vpop.f32.mrf.mxu0
    %v490 = vpop.f32.mrf.mxu0
    %v491 = vadd.f32 0.0, %v490
    %v492 = vpop.f32.mrf.mxu0
    %493 = vmatprep.mubr.bf16.mxu0 0
    %494 = vmatmul.mubr.bf16.gmra.mxu0 %v443
    %v495 = vpop.f32.mrf.mxu0
    %v496 = vadd.f32 0.0, %v495
    %v497 = vpop.f32.mrf.mxu0
    %v498 = vpop.f32.mrf.mxu0
    %v499 = vadd.f32 0.0, %v498
    %v500 = vpop.f32.mrf.mxu0
    %501 = vdwg.mxu0
    %v514 = vunpack.c.l.b16 %v326
    %v515 = vunpack.c.l.b16 %v327
    %v516 = vunpack.c.l.b16 %v328
    %v517 = vunpack.c.l.b16 %v329
    %v518 = vunpack.c.l.b16 %v330
    %v519 = vunpack.c.l.b16 %v331
    %v520 = vunpack.c.l.b16 %v332
    %v521 = vunpack.c.l.b16 %v333
    %v522 = vunpack.c.l.b16 %v334
    %v523 = vunpack.c.l.b16 %v335
    %v524 = vunpack.c.l.b16 %v336
    %v525 = vunpack.c.l.b16 %v337
    %v526 = vpack.c.b16 %v515, %v514
    %v527 = vpack.c.b16 %v517, %v516
    %v528 = vpack.c.b16 %v519, %v518
    %v529 = vpack.c.b16 %v521, %v520
    %v530 = vpack.c.b16 %v523, %v522
    %v531 = vpack.c.b16 %v525, %v524
    %v539 = vsel %vm169, %v363, 0
    %v542 = vsel %vm169, %v364, 0
    %v545 = vsel %vm169, %v365, 0
    %547 = vmatprep.subr.bf16.mxu0 0
    %548 = vmatpush1.bf16.msra.mxu0 0
    %549 = vmatprep.subr.bf16.mxu0 0
    %550 = vmatpush1.bf16.msra.mxu0 0
    %551 = vmatprep.subr.bf16.mxu0 0
    %552 = vmatpush1.bf16.msra.mxu0 %v531
    %553 = vmatprep.subr.bf16.mxu0 0
    %554 = vmatpush1.bf16.msra.mxu0 %v530
    %555 = vmatprep.subr.bf16.mxu0 0
    %556 = vmatpush1.bf16.msra.mxu0 %v529
    %557 = vmatprep.subr.bf16.mxu0 0
    %558 = vmatpush1.bf16.msra.mxu0 %v528
    %559 = vmatprep.subr.bf16.mxu0 0
    %560 = vmatpush1.bf16.msra.mxu0 %v527
    %561 = vmatprep.subr.bf16.mxu0 0
    %562 = vmatpush1.bf16.msra.mxu0 %v526
    %563 = vmatprep.subr.bf16.mxu0 0
    %564 = vmatpush2.bf16.msra.mxu0 0
    %565 = vmatprep.subr.bf16.mxu0 0
    %566 = vmatpush2.bf16.msra.mxu0 0
    %567 = vmatprep.subr.bf16.mxu0 0
    %568 = vmatpush2.bf16.msra.mxu0 0
    %569 = vmatprep.subr.bf16.mxu0 0
    %570 = vmatpush2.bf16.msra.mxu0 0
    %571 = vmatprep.subr.bf16.mxu0 0
    %572 = vmatpush2.bf16.msra.mxu0 0
    %573 = vmatprep.subr.bf16.mxu0 0
    %574 = vmatpush2.bf16.msra.mxu0 0
    %575 = vmatprep.subr.bf16.mxu0 0
    %576 = vmatpush2.bf16.msra.mxu0 0
    %577 = vmatprep.subr.bf16.mxu0 0
    %578 = vmatpush2.bf16.msra.mxu0 0
    %579 = vmatprep.mubr.bf16.mxu0 0
    %580 = vmatmul.mubr.bf16.gmra.mxu0 %v539
    %v581 = vpop.f32.mrf.mxu0
    %v582 = vadd.f32 %v480, %v581
    %v583 = vpop.f32.mrf.mxu0
    %v584 = vpop.f32.mrf.mxu0
    %v585 = vadd.f32 %v483, %v584
    %v586 = vpop.f32.mrf.mxu0
    %587 = vmatprep.mubr.bf16.mxu0 0
    %588 = vmatmul.mubr.bf16.gmra.mxu0 %v542
    %v589 = vpop.f32.mrf.mxu0
    %v590 = vadd.f32 %v488, %v589
    %v591 = vpop.f32.mrf.mxu0
    %v592 = vpop.f32.mrf.mxu0
    %v593 = vadd.f32 %v491, %v592
    %v594 = vpop.f32.mrf.mxu0
    %595 = vmatprep.mubr.bf16.mxu0 0
    %596 = vmatmul.mubr.bf16.gmra.mxu0 %v545
    %v597 = vpop.f32.mrf.mxu0
    %v598 = vadd.f32 %v496, %v597
    %v599 = vpop.f32.mrf.mxu0
    %v600 = vpop.f32.mrf.mxu0
    %v601 = vadd.f32 %v499, %v600
    %v602 = vpop.f32.mrf.mxu0
    %603 = vdwg.mxu0
    %v604 = vld [vmem:[%s1 + $0xd0] sm:$0xf]
    %v605 = vld [vmem:[%s1 + $0xd4] sm:$0xf]
    %v606 = vld [vmem:[%s1 + $0xd8] sm:$0xf]
    %v607 = vld [vmem:[%s1 + $0xdc] sm:$0xf]
    %v608 = vld [vmem:[%s1 + $0xe0] sm:$0xf]
    %v609 = vld [vmem:[%s1 + $0xe4] sm:$0xf]
    %v610 = vld [vmem:[%s1 + $0xe8] sm:$0xf]
    %v611 = vld [vmem:[%s1 + $0xec] sm:$0xf]
    %v612 = vld [vmem:[%s1 + $0xf0] sm:$0xf]
    %v613 = vld [vmem:[%s1 + $0xf4] sm:$0xf]
    %v614 = vld [vmem:[%s1 + $0xf8] sm:$0xf]
    %v615 = vld [vmem:[%s1 + $0xfc] sm:$0xf]
    %vm616 = vcmask 1040384
    %v617 = vrot.slane %v320, 7
    %v618 = vrot.slane %v321, 7
    %v619 = vsel %vm616, %v617, %v618
    %v620 = vrot.slane %v322, 7
    %v621 = vsel %vm616, %v618, %v620
    %v622 = vrot.slane %v323, 7
    %v623 = vsel %vm616, %v620, %v622
    %v624 = vrot.slane %v324, 7
    %v625 = vsel %vm616, %v622, %v624
    %v626 = vrot.slane %v325, 7
    %v627 = vsel %vm616, %v624, %v626
    %v634 = vsel %vm616, 0.0, %v617
    %v635 = vpack.c.bf16 %v619, %v634
    %v636 = vpack.c.bf16 %v623, %v621
    %v637 = vpack.c.bf16 %v627, %v625
    %v650 = vunpack.c.l.b16 %v604
    %v651 = vunpack.c.l.b16 %v605
    %v652 = vunpack.c.l.b16 %v606
    %v653 = vunpack.c.l.b16 %v607
    %v654 = vunpack.c.l.b16 %v608
    %v655 = vunpack.c.l.b16 %v609
    %v656 = vunpack.c.l.b16 %v610
    %v657 = vunpack.c.l.b16 %v611
    %v658 = vunpack.c.l.b16 %v612
    %v659 = vunpack.c.l.b16 %v613
    %v660 = vunpack.c.l.b16 %v614
    %v661 = vunpack.c.l.b16 %v615
    %v662 = vpack.c.b16 %v651, %v650
    %v663 = vpack.c.b16 %v653, %v652
    %v664 = vpack.c.b16 %v655, %v654
    %v665 = vpack.c.b16 %v657, %v656
    %v666 = vpack.c.b16 %v659, %v658
    %v667 = vpack.c.b16 %v661, %v660
    %v675 = vsel %vm169, %v635, 0
    %v678 = vsel %vm169, %v636, 0
    %v681 = vsel %vm169, %v637, 0
    %683 = vmatprep.subr.bf16.mxu0 0
    %684 = vmatpush1.bf16.msra.mxu0 0
    %685 = vmatprep.subr.bf16.mxu0 0
    %686 = vmatpush1.bf16.msra.mxu0 0
    %687 = vmatprep.subr.bf16.mxu0 0
    %688 = vmatpush1.bf16.msra.mxu0 %v667
    %689 = vmatprep.subr.bf16.mxu0 0
    %690 = vmatpush1.bf16.msra.mxu0 %v666
    %691 = vmatprep.subr.bf16.mxu0 0
    %692 = vmatpush1.bf16.msra.mxu0 %v665
    %693 = vmatprep.subr.bf16.mxu0 0
    %694 = vmatpush1.bf16.msra.mxu0 %v664
    %695 = vmatprep.subr.bf16.mxu0 0
    %696 = vmatpush1.bf16.msra.mxu0 %v663
    %697 = vmatprep.subr.bf16.mxu0 0
    %698 = vmatpush1.bf16.msra.mxu0 %v662
    %699 = vmatprep.subr.bf16.mxu0 0
    %700 = vmatpush2.bf16.msra.mxu0 0
    %701 = vmatprep.subr.bf16.mxu0 0
    %702 = vmatpush2.bf16.msra.mxu0 0
    %703 = vmatprep.subr.bf16.mxu0 0
    %704 = vmatpush2.bf16.msra.mxu0 0
    %705 = vmatprep.subr.bf16.mxu0 0
    %706 = vmatpush2.bf16.msra.mxu0 0
    %707 = vmatprep.subr.bf16.mxu0 0
    %708 = vmatpush2.bf16.msra.mxu0 0
    %709 = vmatprep.subr.bf16.mxu0 0
    %710 = vmatpush2.bf16.msra.mxu0 0
    %711 = vmatprep.subr.bf16.mxu0 0
    %712 = vmatpush2.bf16.msra.mxu0 0
    %713 = vmatprep.subr.bf16.mxu0 0
    %714 = vmatpush2.bf16.msra.mxu0 0
    %715 = vmatprep.mubr.bf16.mxu0 0
    %716 = vmatmul.mubr.bf16.gmra.mxu0 %v675
    %v717 = vpop.f32.mrf.mxu0
    %v718 = vadd.f32 0.0, %v717
    %v719 = vpop.f32.mrf.mxu0
    %v720 = vpop.f32.mrf.mxu0
    %v721 = vadd.f32 0.0, %v720
    %v722 = vpop.f32.mrf.mxu0
    %723 = vmatprep.mubr.bf16.mxu0 0
    %724 = vmatmul.mubr.bf16.gmra.mxu0 %v678
    %v725 = vpop.f32.mrf.mxu0
    %v726 = vadd.f32 0.0, %v725
    %v727 = vpop.f32.mrf.mxu0
    %v728 = vpop.f32.mrf.mxu0
    %v729 = vadd.f32 0.0, %v728
    %v730 = vpop.f32.mrf.mxu0
    %731 = vmatprep.mubr.bf16.mxu0 0
    %732 = vmatmul.mubr.bf16.gmra.mxu0 %v681
    %v733 = vpop.f32.mrf.mxu0
    %v734 = vadd.f32 0.0, %v733
    %v735 = vpop.f32.mrf.mxu0
    %v736 = vpop.f32.mrf.mxu0
    %v737 = vadd.f32 0.0, %v736
    %v738 = vpop.f32.mrf.mxu0
    %739 = vdwg.mxu0
    %v740 = vadd.f32 %v582, %v718
    %v741 = vadd.f32 %v585, %v721
    %v742 = vadd.f32 %v590, %v726
    %v743 = vadd.f32 %v593, %v729
    %v744 = vadd.f32 %v598, %v734
    %v745 = vadd.f32 %v601, %v737
    %v746 = vld [vmem:[%s1 + $0x100] sm:$0xf]
    %v747 = vld [vmem:[%s1 + $0x104] sm:$0xf]
    %v748 = vld [vmem:[%s1 + $0x108] sm:$0xf]
    %v749 = vld [vmem:[%s1 + $0x10c] sm:$0xf]
    %v750 = vld [vmem:[%s1 + $0x110] sm:$0xf]
    %v751 = vld [vmem:[%s1 + $0x114] sm:$0xf]
    %v752 = vld [vmem:[%s1 + $0x118] sm:$0xf]
    %v753 = vld [vmem:[%s1 + $0x11c] sm:$0xf]
    %v754 = vld [vmem:[%s1 + $0x120] sm:$0xf]
    %v755 = vld [vmem:[%s1 + $0x124] sm:$0xf]
    %v756 = vld [vmem:[%s1 + $0x128] sm:$0xf]
    %v757 = vld [vmem:[%s1 + $0x12c] sm:$0xf]
    %v758 = vpack.c.bf16 %v321, %v320
    %v759 = vpack.c.bf16 %v323, %v322
    %v760 = vpack.c.bf16 %v325, %v324
    %v773 = vunpack.c.l.b16 %v746
    %v774 = vunpack.c.l.b16 %v747
    %v775 = vunpack.c.l.b16 %v748
    %v776 = vunpack.c.l.b16 %v749
    %v777 = vunpack.c.l.b16 %v750
    %v778 = vunpack.c.l.b16 %v751
    %v779 = vunpack.c.l.b16 %v752
    %v780 = vunpack.c.l.b16 %v753
    %v781 = vunpack.c.l.b16 %v754
    %v782 = vunpack.c.l.b16 %v755
    %v783 = vunpack.c.l.b16 %v756
    %v784 = vunpack.c.l.b16 %v757
    %v785 = vpack.c.b16 %v774, %v773
    %v786 = vpack.c.b16 %v776, %v775
    %v787 = vpack.c.b16 %v778, %v777
    %v788 = vpack.c.b16 %v780, %v779
    %v789 = vpack.c.b16 %v782, %v781
    %v790 = vpack.c.b16 %v784, %v783
    %v798 = vsel %vm169, %v758, 0
    %v801 = vsel %vm169, %v759, 0
    %v804 = vsel %vm169, %v760, 0
    %806 = vmatprep.subr.bf16.mxu0 0
    %807 = vmatpush1.bf16.msra.mxu0 0
    %808 = vmatprep.subr.bf16.mxu0 0
    %809 = vmatpush1.bf16.msra.mxu0 0
    %810 = vmatprep.subr.bf16.mxu0 0
    %811 = vmatpush1.bf16.msra.mxu0 %v790
    %812 = vmatprep.subr.bf16.mxu0 0
    %813 = vmatpush1.bf16.msra.mxu0 %v789
    %814 = vmatprep.subr.bf16.mxu0 0
    %815 = vmatpush1.bf16.msra.mxu0 %v788
    %816 = vmatprep.subr.bf16.mxu0 0
    %817 = vmatpush1.bf16.msra.mxu0 %v787
    %818 = vmatprep.subr.bf16.mxu0 0
    %819 = vmatpush1.bf16.msra.mxu0 %v786
    %820 = vmatprep.subr.bf16.mxu0 0
    %821 = vmatpush1.bf16.msra.mxu0 %v785
    %822 = vmatprep.subr.bf16.mxu0 0
    %823 = vmatpush2.bf16.msra.mxu0 0
    %824 = vmatprep.subr.bf16.mxu0 0
    %825 = vmatpush2.bf16.msra.mxu0 0
    %826 = vmatprep.subr.bf16.mxu0 0
    %827 = vmatpush2.bf16.msra.mxu0 0
    %828 = vmatprep.subr.bf16.mxu0 0
    %829 = vmatpush2.bf16.msra.mxu0 0
    %830 = vmatprep.subr.bf16.mxu0 0
    %831 = vmatpush2.bf16.msra.mxu0 0
    %832 = vmatprep.subr.bf16.mxu0 0
    %833 = vmatpush2.bf16.msra.mxu0 0
    %834 = vmatprep.subr.bf16.mxu0 0
    %835 = vmatpush2.bf16.msra.mxu0 0
    %836 = vmatprep.subr.bf16.mxu0 0
    %837 = vmatpush2.bf16.msra.mxu0 0
    %838 = vmatprep.mubr.bf16.mxu0 0
    %839 = vmatmul.mubr.bf16.gmra.mxu0 %v798
    %v840 = vpop.f32.mrf.mxu0
    %v841 = vadd.f32 0.0, %v840
    %v842 = vpop.f32.mrf.mxu0
    %v843 = vpop.f32.mrf.mxu0
    %v844 = vadd.f32 0.0, %v843
    %v845 = vpop.f32.mrf.mxu0
    %846 = vmatprep.mubr.bf16.mxu0 0
    %847 = vmatmul.mubr.bf16.gmra.mxu0 %v801
    %v848 = vpop.f32.mrf.mxu0
    %v849 = vadd.f32 0.0, %v848
    %v850 = vpop.f32.mrf.mxu0
    %v851 = vpop.f32.mrf.mxu0
    %v852 = vadd.f32 0.0, %v851
    %v853 = vpop.f32.mrf.mxu0
    %854 = vmatprep.mubr.bf16.mxu0 0
    %855 = vmatmul.mubr.bf16.gmra.mxu0 %v804
    %v856 = vpop.f32.mrf.mxu0
    %v857 = vadd.f32 0.0, %v856
    %v858 = vpop.f32.mrf.mxu0
    %v859 = vpop.f32.mrf.mxu0
    %v860 = vadd.f32 0.0, %v859
    %v861 = vpop.f32.mrf.mxu0
    %862 = vdwg.mxu0
    %v863 = vadd.f32 %v740, %v841
    %v864 = vadd.f32 %v741, %v844
    %v865 = vadd.f32 %v742, %v849
    %v866 = vadd.f32 %v743, %v852
    %v867 = vadd.f32 %v744, %v857
    %v868 = vadd.f32 %v745, %v860
    %v869 = vld [vmem:[%s1 + $0x130] sm:$0xf]
    %v870 = vld [vmem:[%s1 + $0x134] sm:$0xf]
    %v871 = vld [vmem:[%s1 + $0x138] sm:$0xf]
    %v872 = vld [vmem:[%s1 + $0x13c] sm:$0xf]
    %v873 = vld [vmem:[%s1 + $0x140] sm:$0xf]
    %v874 = vld [vmem:[%s1 + $0x144] sm:$0xf]
    %v875 = vld [vmem:[%s1 + $0x148] sm:$0xf]
    %v876 = vld [vmem:[%s1 + $0x14c] sm:$0xf]
    %v877 = vld [vmem:[%s1 + $0x150] sm:$0xf]
    %v878 = vld [vmem:[%s1 + $0x154] sm:$0xf]
    %v879 = vld [vmem:[%s1 + $0x158] sm:$0xf]
    %v880 = vld [vmem:[%s1 + $0x15c] sm:$0xf]
    %vm881 = vcmask 1046528
    %v882 = vrot.slane %v320, 1
    %v883 = vrot.slane %v321, 1
    %v884 = vsel %vm881, %v882, %v883
    %v885 = vrot.slane %v322, 1
    %v886 = vsel %vm881, %v883, %v885
    %v887 = vrot.slane %v323, 1
    %v888 = vsel %vm881, %v885, %v887
    %v889 = vrot.slane %v324, 1
    %v890 = vsel %vm881, %v887, %v889
    %v891 = vrot.slane %v325, 1
    %v892 = vsel %vm881, %v889, %v891
    %v899 = vsel %vm881, %v891, 0.0
    %v900 = vpack.c.bf16 %v886, %v884
    %v901 = vpack.c.bf16 %v890, %v888
    %v902 = vpack.c.bf16 %v899, %v892
    %v915 = vunpack.c.l.b16 %v869
    %v916 = vunpack.c.l.b16 %v870
    %v917 = vunpack.c.l.b16 %v871
    %v918 = vunpack.c.l.b16 %v872
    %v919 = vunpack.c.l.b16 %v873
    %v920 = vunpack.c.l.b16 %v874
    %v921 = vunpack.c.l.b16 %v875
    %v922 = vunpack.c.l.b16 %v876
    %v923 = vunpack.c.l.b16 %v877
    %v924 = vunpack.c.l.b16 %v878
    %v925 = vunpack.c.l.b16 %v879
    %v926 = vunpack.c.l.b16 %v880
    %v927 = vpack.c.b16 %v916, %v915
    %v928 = vpack.c.b16 %v918, %v917
    %v929 = vpack.c.b16 %v920, %v919
    %v930 = vpack.c.b16 %v922, %v921
    %v931 = vpack.c.b16 %v924, %v923
    %v932 = vpack.c.b16 %v926, %v925
    %v940 = vsel %vm169, %v900, 0
    %v943 = vsel %vm169, %v901, 0
    %v946 = vsel %vm169, %v902, 0
    %948 = vmatprep.subr.bf16.mxu0 0
    %949 = vmatpush1.bf16.msra.mxu0 0
    %950 = vmatprep.subr.bf16.mxu0 0
    %951 = vmatpush1.bf16.msra.mxu0 0
    %952 = vmatprep.subr.bf16.mxu0 0
    %953 = vmatpush1.bf16.msra.mxu0 %v932
    %954 = vmatprep.subr.bf16.mxu0 0
    %955 = vmatpush1.bf16.msra.mxu0 %v931
    %956 = vmatprep.subr.bf16.mxu0 0
    %957 = vmatpush1.bf16.msra.mxu0 %v930
    %958 = vmatprep.subr.bf16.mxu0 0
    %959 = vmatpush1.bf16.msra.mxu0 %v929
    %960 = vmatprep.subr.bf16.mxu0 0
    %961 = vmatpush1.bf16.msra.mxu0 %v928
    %962 = vmatprep.subr.bf16.mxu0 0
    %963 = vmatpush1.bf16.msra.mxu0 %v927
    %964 = vmatprep.subr.bf16.mxu0 0
    %965 = vmatpush2.bf16.msra.mxu0 0
    %966 = vmatprep.subr.bf16.mxu0 0
    %967 = vmatpush2.bf16.msra.mxu0 0
    %968 = vmatprep.subr.bf16.mxu0 0
    %969 = vmatpush2.bf16.msra.mxu0 0
    %970 = vmatprep.subr.bf16.mxu0 0
    %971 = vmatpush2.bf16.msra.mxu0 0
    %972 = vmatprep.subr.bf16.mxu0 0
    %973 = vmatpush2.bf16.msra.mxu0 0
    %974 = vmatprep.subr.bf16.mxu0 0
    %975 = vmatpush2.bf16.msra.mxu0 0
    %976 = vmatprep.subr.bf16.mxu0 0
    %977 = vmatpush2.bf16.msra.mxu0 0
    %978 = vmatprep.subr.bf16.mxu0 0
    %979 = vmatpush2.bf16.msra.mxu0 0
    %980 = vmatprep.mubr.bf16.mxu0 0
    %981 = vmatmul.mubr.bf16.gmra.mxu0 %v940
    %v982 = vpop.f32.mrf.mxu0
    %v983 = vadd.f32 0.0, %v982
    %v984 = vpop.f32.mrf.mxu0
    %v985 = vpop.f32.mrf.mxu0
    %v986 = vadd.f32 0.0, %v985
    %v987 = vpop.f32.mrf.mxu0
    %988 = vmatprep.mubr.bf16.mxu0 0
    %989 = vmatmul.mubr.bf16.gmra.mxu0 %v943
    %v990 = vpop.f32.mrf.mxu0
    %v991 = vadd.f32 0.0, %v990
    %v992 = vpop.f32.mrf.mxu0
    %v993 = vpop.f32.mrf.mxu0
    %v994 = vadd.f32 0.0, %v993
    %v995 = vpop.f32.mrf.mxu0
    %996 = vmatprep.mubr.bf16.mxu0 0
    %997 = vmatmul.mubr.bf16.gmra.mxu0 %v946
    %v998 = vpop.f32.mrf.mxu0
    %v999 = vadd.f32 0.0, %v998
    %v1000 = vpop.f32.mrf.mxu0
    %v1001 = vpop.f32.mrf.mxu0
    %v1002 = vadd.f32 0.0, %v1001
    %v1003 = vpop.f32.mrf.mxu0
    %1004 = vdwg.mxu0
    %v1005 = vadd.f32 %v863, %v983
    %v1006 = vadd.f32 %v864, %v986
    %v1007 = vadd.f32 %v865, %v991
    %v1008 = vadd.f32 %v866, %v994
    %v1009 = vadd.f32 %v867, %v999
    %v1010 = vadd.f32 %v868, %v1002
    %v1011 = vld [vmem:[%s1 + $0x160] sm:$0xf]
    %v1012 = vld [vmem:[%s1 + $0x164] sm:$0xf]
    %v1013 = vld [vmem:[%s1 + $0x168] sm:$0xf]
    %v1014 = vld [vmem:[%s1 + $0x16c] sm:$0xf]
    %v1015 = vld [vmem:[%s1 + $0x170] sm:$0xf]
    %v1016 = vld [vmem:[%s1 + $0x174] sm:$0xf]
    %v1017 = vld [vmem:[%s1 + $0x178] sm:$0xf]
    %v1018 = vld [vmem:[%s1 + $0x17c] sm:$0xf]
    %v1019 = vld [vmem:[%s1 + $0x180] sm:$0xf]
    %v1020 = vld [vmem:[%s1 + $0x184] sm:$0xf]
    %v1021 = vld [vmem:[%s1 + $0x188] sm:$0xf]
    %v1022 = vld [vmem:[%s1 + $0x18c] sm:$0xf]
    %vm1023 = vcmask 1045504
    %v1024 = vrot.slane %v320, 2
    %v1025 = vrot.slane %v321, 2
    %v1026 = vsel %vm1023, %v1024, %v1025
    %v1027 = vrot.slane %v322, 2
    %v1028 = vsel %vm1023, %v1025, %v1027
    %v1029 = vrot.slane %v323, 2
    %v1030 = vsel %vm1023, %v1027, %v1029
    %v1031 = vrot.slane %v324, 2
    %v1032 = vsel %vm1023, %v1029, %v1031
    %v1033 = vrot.slane %v325, 2
    %v1034 = vsel %vm1023, %v1031, %v1033
    %v1041 = vsel %vm1023, %v1033, 0.0
    %v1042 = vpack.c.bf16 %v1028, %v1026
    %v1043 = vpack.c.bf16 %v1032, %v1030
    %v1044 = vpack.c.bf16 %v1041, %v1034
    %v1057 = vunpack.c.l.b16 %v1011
    %v1058 = vunpack.c.l.b16 %v1012
    %v1059 = vunpack.c.l.b16 %v1013
    %v1060 = vunpack.c.l.b16 %v1014
    %v1061 = vunpack.c.l.b16 %v1015
    %v1062 = vunpack.c.l.b16 %v1016
    %v1063 = vunpack.c.l.b16 %v1017
    %v1064 = vunpack.c.l.b16 %v1018
    %v1065 = vunpack.c.l.b16 %v1019
    %v1066 = vunpack.c.l.b16 %v1020
    %v1067 = vunpack.c.l.b16 %v1021
    %v1068 = vunpack.c.l.b16 %v1022
    %v1069 = vpack.c.b16 %v1058, %v1057
    %v1070 = vpack.c.b16 %v1060, %v1059
    %v1071 = vpack.c.b16 %v1062, %v1061
    %v1072 = vpack.c.b16 %v1064, %v1063
    %v1073 = vpack.c.b16 %v1066, %v1065
    %v1074 = vpack.c.b16 %v1068, %v1067
    %v1082 = vsel %vm169, %v1042, 0
    %v1085 = vsel %vm169, %v1043, 0
    %v1088 = vsel %vm169, %v1044, 0
    %1090 = vmatprep.subr.bf16.mxu0 0
    %1091 = vmatpush1.bf16.msra.mxu0 0
    %1092 = vmatprep.subr.bf16.mxu0 0
    %1093 = vmatpush1.bf16.msra.mxu0 0
    %1094 = vmatprep.subr.bf16.mxu0 0
    %1095 = vmatpush1.bf16.msra.mxu0 %v1074
    %1096 = vmatprep.subr.bf16.mxu0 0
    %1097 = vmatpush1.bf16.msra.mxu0 %v1073
    %1098 = vmatprep.subr.bf16.mxu0 0
    %1099 = vmatpush1.bf16.msra.mxu0 %v1072
    %1100 = vmatprep.subr.bf16.mxu0 0
    %1101 = vmatpush1.bf16.msra.mxu0 %v1071
    %1102 = vmatprep.subr.bf16.mxu0 0
    %1103 = vmatpush1.bf16.msra.mxu0 %v1070
    %1104 = vmatprep.subr.bf16.mxu0 0
    %1105 = vmatpush1.bf16.msra.mxu0 %v1069
    %1106 = vmatprep.subr.bf16.mxu0 0
    %1107 = vmatpush2.bf16.msra.mxu0 0
    %1108 = vmatprep.subr.bf16.mxu0 0
    %1109 = vmatpush2.bf16.msra.mxu0 0
    %1110 = vmatprep.subr.bf16.mxu0 0
    %1111 = vmatpush2.bf16.msra.mxu0 0
    %1112 = vmatprep.subr.bf16.mxu0 0
    %1113 = vmatpush2.bf16.msra.mxu0 0
    %1114 = vmatprep.subr.bf16.mxu0 0
    %1115 = vmatpush2.bf16.msra.mxu0 0
    %1116 = vmatprep.subr.bf16.mxu0 0
    %1117 = vmatpush2.bf16.msra.mxu0 0
    %1118 = vmatprep.subr.bf16.mxu0 0
    %1119 = vmatpush2.bf16.msra.mxu0 0
    %1120 = vmatprep.subr.bf16.mxu0 0
    %1121 = vmatpush2.bf16.msra.mxu0 0
    %1122 = vmatprep.mubr.bf16.mxu0 0
    %1123 = vmatmul.mubr.bf16.gmra.mxu0 %v1082
    %v1124 = vpop.f32.mrf.mxu0
    %v1125 = vadd.f32 0.0, %v1124
    %v1126 = vpop.f32.mrf.mxu0
    %v1127 = vpop.f32.mrf.mxu0
    %v1128 = vadd.f32 0.0, %v1127
    %v1129 = vpop.f32.mrf.mxu0
    %1130 = vmatprep.mubr.bf16.mxu0 0
    %1131 = vmatmul.mubr.bf16.gmra.mxu0 %v1085
    %v1132 = vpop.f32.mrf.mxu0
    %v1133 = vadd.f32 0.0, %v1132
    %v1134 = vpop.f32.mrf.mxu0
    %v1135 = vpop.f32.mrf.mxu0
    %v1136 = vadd.f32 0.0, %v1135
    %v1137 = vpop.f32.mrf.mxu0
    %1138 = vmatprep.mubr.bf16.mxu0 0
    %1139 = vmatmul.mubr.bf16.gmra.mxu0 %v1088
    %v1140 = vpop.f32.mrf.mxu0
    %v1141 = vadd.f32 0.0, %v1140
    %v1142 = vpop.f32.mrf.mxu0
    %v1143 = vpop.f32.mrf.mxu0
    %v1144 = vadd.f32 0.0, %v1143
    %v1145 = vpop.f32.mrf.mxu0
    %1146 = vdwg.mxu0
    %v1147 = vadd.f32 %v1005, %v1125
    %v1148 = vadd.f32 %v1006, %v1128
    %v1149 = vadd.f32 %v1007, %v1133
    %v1150 = vadd.f32 %v1008, %v1136
    %v1151 = vadd.f32 %v1009, %v1141
    %v1152 = vadd.f32 %v1010, %v1144
    %v1153 = vld [vmem:[%s1 + $0x190] sm:$0xf]
    %v1154 = vld [vmem:[%s1 + $0x194] sm:$0xf]
    %v1155 = vld [vmem:[%s1 + $0x198] sm:$0xf]
    %v1156 = vld [vmem:[%s1 + $0x19c] sm:$0xf]
    %v1157 = vld [vmem:[%s1 + $0x1a0] sm:$0xf]
    %v1158 = vld [vmem:[%s1 + $0x1a4] sm:$0xf]
    %v1159 = vld [vmem:[%s1 + $0x1a8] sm:$0xf]
    %v1160 = vld [vmem:[%s1 + $0x1ac] sm:$0xf]
    %v1161 = vld [vmem:[%s1 + $0x1b0] sm:$0xf]
    %v1162 = vld [vmem:[%s1 + $0x1b4] sm:$0xf]
    %v1163 = vld [vmem:[%s1 + $0x1b8] sm:$0xf]
    %v1164 = vld [vmem:[%s1 + $0x1bc] sm:$0xf]
    %vm1165 = vcmask 1044480
    %v1166 = vrot.slane %v320, 3
    %v1167 = vrot.slane %v321, 3
    %v1168 = vsel %vm1165, %v1166, %v1167
    %v1169 = vrot.slane %v322, 3
    %v1170 = vsel %vm1165, %v1167, %v1169
    %v1171 = vrot.slane %v323, 3
    %v1172 = vsel %vm1165, %v1169, %v1171
    %v1173 = vrot.slane %v324, 3
    %v1174 = vsel %vm1165, %v1171, %v1173
    %v1175 = vrot.slane %v325, 3
    %v1176 = vsel %vm1165, %v1173, %v1175
    %v1183 = vsel %vm1165, %v1175, 0.0
    %v1184 = vpack.c.bf16 %v1170, %v1168
    %v1185 = vpack.c.bf16 %v1174, %v1172
    %v1186 = vpack.c.bf16 %v1183, %v1176
    %v1199 = vunpack.c.l.b16 %v1153
    %v1200 = vunpack.c.l.b16 %v1154
    %v1201 = vunpack.c.l.b16 %v1155
    %v1202 = vunpack.c.l.b16 %v1156
    %v1203 = vunpack.c.l.b16 %v1157
    %v1204 = vunpack.c.l.b16 %v1158
    %v1205 = vunpack.c.l.b16 %v1159
    %v1206 = vunpack.c.l.b16 %v1160
    %v1207 = vunpack.c.l.b16 %v1161
    %v1208 = vunpack.c.l.b16 %v1162
    %v1209 = vunpack.c.l.b16 %v1163
    %v1210 = vunpack.c.l.b16 %v1164
    %v1211 = vpack.c.b16 %v1200, %v1199
    %v1212 = vpack.c.b16 %v1202, %v1201
    %v1213 = vpack.c.b16 %v1204, %v1203
    %v1214 = vpack.c.b16 %v1206, %v1205
    %v1215 = vpack.c.b16 %v1208, %v1207
    %v1216 = vpack.c.b16 %v1210, %v1209
    %v1224 = vsel %vm169, %v1184, 0
    %v1227 = vsel %vm169, %v1185, 0
    %v1230 = vsel %vm169, %v1186, 0
    %1232 = vmatprep.subr.bf16.mxu0 0
    %1233 = vmatpush1.bf16.msra.mxu0 0
    %1234 = vmatprep.subr.bf16.mxu0 0
    %1235 = vmatpush1.bf16.msra.mxu0 0
    %1236 = vmatprep.subr.bf16.mxu0 0
    %1237 = vmatpush1.bf16.msra.mxu0 %v1216
    %1238 = vmatprep.subr.bf16.mxu0 0
    %1239 = vmatpush1.bf16.msra.mxu0 %v1215
    %1240 = vmatprep.subr.bf16.mxu0 0
    %1241 = vmatpush1.bf16.msra.mxu0 %v1214
    %1242 = vmatprep.subr.bf16.mxu0 0
    %1243 = vmatpush1.bf16.msra.mxu0 %v1213
    %1244 = vmatprep.subr.bf16.mxu0 0
    %1245 = vmatpush1.bf16.msra.mxu0 %v1212
    %1246 = vmatprep.subr.bf16.mxu0 0
    %1247 = vmatpush1.bf16.msra.mxu0 %v1211
    %1248 = vmatprep.subr.bf16.mxu0 0
    %1249 = vmatpush2.bf16.msra.mxu0 0
    %1250 = vmatprep.subr.bf16.mxu0 0
    %1251 = vmatpush2.bf16.msra.mxu0 0
    %1252 = vmatprep.subr.bf16.mxu0 0
    %1253 = vmatpush2.bf16.msra.mxu0 0
    %1254 = vmatprep.subr.bf16.mxu0 0
    %1255 = vmatpush2.bf16.msra.mxu0 0
    %1256 = vmatprep.subr.bf16.mxu0 0
    %1257 = vmatpush2.bf16.msra.mxu0 0
    %1258 = vmatprep.subr.bf16.mxu0 0
    %1259 = vmatpush2.bf16.msra.mxu0 0
    %1260 = vmatprep.subr.bf16.mxu0 0
    %1261 = vmatpush2.bf16.msra.mxu0 0
    %1262 = vmatprep.subr.bf16.mxu0 0
    %1263 = vmatpush2.bf16.msra.mxu0 0
    %1264 = vmatprep.mubr.bf16.mxu0 0
    %1265 = vmatmul.mubr.bf16.gmra.mxu0 %v1224
    %v1266 = vpop.f32.mrf.mxu0
    %v1267 = vadd.f32 0.0, %v1266
    %v1268 = vpop.f32.mrf.mxu0
    %v1269 = vpop.f32.mrf.mxu0
    %v1270 = vadd.f32 0.0, %v1269
    %v1271 = vpop.f32.mrf.mxu0
    %1272 = vmatprep.mubr.bf16.mxu0 0
    %1273 = vmatmul.mubr.bf16.gmra.mxu0 %v1227
    %v1274 = vpop.f32.mrf.mxu0
    %v1275 = vadd.f32 0.0, %v1274
    %v1276 = vpop.f32.mrf.mxu0
    %v1277 = vpop.f32.mrf.mxu0
    %v1278 = vadd.f32 0.0, %v1277
    %v1279 = vpop.f32.mrf.mxu0
    %1280 = vmatprep.mubr.bf16.mxu0 0
    %1281 = vmatmul.mubr.bf16.gmra.mxu0 %v1230
    %v1282 = vpop.f32.mrf.mxu0
    %v1283 = vadd.f32 0.0, %v1282
    %v1284 = vpop.f32.mrf.mxu0
    %v1285 = vpop.f32.mrf.mxu0
    %v1286 = vadd.f32 0.0, %v1285
    %v1287 = vpop.f32.mrf.mxu0
    %1288 = vdwg.mxu0
    %v1289 = vadd.f32 %v1147, %v1267
    %v1290 = vadd.f32 %v1148, %v1270
    %v1291 = vadd.f32 %v1149, %v1275
    %v1292 = vadd.f32 %v1150, %v1278
    %v1293 = vadd.f32 %v1151, %v1283
    %v1294 = vadd.f32 %v1152, %v1286
    %v1295 = vld [vmem:[%s3 + $0x2] sm:$0x1]
    %v1296 = vlaneseq
    %v1297 = vshrl.u32 %v1296, 7
    %v1298 = vsub.s32 0, %v1297
    %v1299 = vrot.slane %v1295, %v1298
    %v1300 = vadd.f32 %v1289, %v1299
    %v1301 = vadd.f32 %v1290, %v1299
    %v1302 = vadd.f32 %v1291, %v1299
    %v1303 = vadd.f32 %v1292, %v1299
    %v1304 = vadd.f32 %v1293, %v1299
    %v1305 = vadd.f32 %v1294, %v1299
    %vm1306 = vcmp.gt.f32.partialorder %v1300, 0.0
    %vm1307 = vcmp.gt.f32.partialorder %v1301, 0.0
    %vm1308 = vcmp.gt.f32.partialorder %v1302, 0.0
    %vm1309 = vcmp.gt.f32.partialorder %v1303, 0.0
    %vm1310 = vcmp.gt.f32.partialorder %v1304, 0.0
    %vm1311 = vcmp.gt.f32.partialorder %v1305, 0.0
    %v1312 = vld [vmem:[%s3 + $0x3] sm:$0x1]
    %v1313 = vlaneseq
    %v1314 = vshrl.u32 %v1313, 7
    %v1315 = vsub.s32 0, %v1314
    %v1316 = vrot.slane %v1312, %v1315
    %v1317 = vmul.f32 %v1316, %v1300
    %v1318 = vmul.f32 %v1316, %v1301
    %v1319 = vmul.f32 %v1316, %v1302
    %v1320 = vmul.f32 %v1316, %v1303
    %v1321 = vmul.f32 %v1316, %v1304
    %v1322 = vmul.f32 %v1316, %v1305
    %v1323 = vsel %vm1306, %v1300, %v1317
    %v1324 = vsel %vm1307, %v1301, %v1318
    %v1325 = vsel %vm1308, %v1302, %v1319
    %v1326 = vsel %vm1309, %v1303, %v1320
    %v1327 = vsel %vm1310, %v1304, %v1321
    %v1328 = vsel %vm1311, %v1305, %v1322
    %vm1329 = vcmask 785411
    %v1330 = vsel %vm1329, %v1323, -inf
    %v1331 = vsel %vm169, %v1324, -inf
    %vm1332 = vcmask 780288
    %v1333 = vsel %vm1332, %v1325, -inf
    %v1334 = vmax.f32 %v1330, %v1331
    %v1335 = vmax.f32 %v1334, %v1333
    %v1336 = vrot.slane %v1335, 4
    %v1337 = vmax.f32 %v1335, %v1336
    %v1338 = vrot.slane %v1337, 2
    %v1339 = vmax.f32 %v1337, %v1338
    %v1340 = vrot.slane %v1339, 1
    %v1341 = vmax.f32 %v1339, %v1340
    %v1342 = vsel %vm1329, %v1326, -inf
    %v1343 = vsel %vm169, %v1327, -inf
    %v1344 = vsel %vm1332, %v1328, -inf
    %v1345 = vmax.f32 %v1342, %v1343
    %v1346 = vmax.f32 %v1345, %v1344
    %v1347 = vrot.slane %v1346, 4
    %v1348 = vmax.f32 %v1346, %v1347
    %v1349 = vrot.slane %v1348, 2
    %v1350 = vmax.f32 %v1348, %v1349
    %v1351 = vrot.slane %v1350, 1
    %v1352 = vmax.f32 %v1350, %v1351
    %v1353 = vsel %vm616, %v1341, %v1352
    %v1354 = vpack.c.bf16 %v1353, %v1353
    %v1355 = vld [vmem:[%s2] sm:$0xf]
    %v1356 = vld [vmem:[%s2 + $0x4] sm:$0xf]
    %v1357 = vld [vmem:[%s2 + $0x8] sm:$0xf]
    %v1358 = vld [vmem:[%s2 + $0xc] sm:$0xf]
    %v1359 = vld [vmem:[%s2 + $0x10] sm:$0xf]
    %v1360 = vld [vmem:[%s2 + $0x14] sm:$0xf]
    %v1361 = vld [vmem:[%s2 + $0x18] sm:$0xf]
    %v1362 = vld [vmem:[%s2 + $0x1c] sm:$0xf]
    %v1363 = vld [vmem:[%s2 + $0x20] sm:$0xf]
    %v1364 = vld [vmem:[%s2 + $0x24] sm:$0xf]
    %v1365 = vld [vmem:[%s2 + $0x28] sm:$0xf]
    %v1366 = vld [vmem:[%s2 + $0x2c] sm:$0xf]
    %v1367 = vld [vmem:[%s3 + $0x4] sm:$0x1]
    %v1368 = vlaneseq
    %v1369 = vshrl.u32 %v1368, 7
    %v1370 = vsub.s32 0, %v1369
    %v1371 = vrot.slane %v1367, %v1370
    %v1384 = vunpack.c.l.b16 %v1355
    %v1385 = vunpack.c.l.b16 %v1356
    %v1386 = vunpack.c.l.b16 %v1357
    %v1387 = vunpack.c.l.b16 %v1358
    %v1388 = vunpack.c.l.b16 %v1359
    %v1389 = vunpack.c.l.b16 %v1360
    %v1390 = vunpack.c.l.b16 %v1361
    %v1391 = vunpack.c.l.b16 %v1362
    %v1392 = vunpack.c.l.b16 %v1363
    %v1393 = vunpack.c.l.b16 %v1364
    %v1394 = vunpack.c.l.b16 %v1365
    %v1395 = vunpack.c.l.b16 %v1366
    %v1396 = vpack.c.b16 %v1385, %v1384
    %v1397 = vpack.c.b16 %v1387, %v1386
    %v1398 = vpack.c.b16 %v1389, %v1388
    %v1399 = vpack.c.b16 %v1391, %v1390
    %v1400 = vpack.c.b16 %v1393, %v1392
    %v1401 = vpack.c.b16 %v1395, %v1394
    %v1409 = vsel %vm169, %v1354, 0
    %1411 = vmatprep.subr.bf16.mxu0 0
    %1412 = vmatpush1.bf16.msra.mxu0 0
    %1413 = vmatprep.subr.bf16.mxu0 0
    %1414 = vmatpush1.bf16.msra.mxu0 0
    %1415 = vmatprep.subr.bf16.mxu0 0
    %1416 = vmatpush1.bf16.msra.mxu0 %v1401
    %1417 = vmatprep.subr.bf16.mxu0 0
    %1418 = vmatpush1.bf16.msra.mxu0 %v1400
    %1419 = vmatprep.subr.bf16.mxu0 0
    %1420 = vmatpush1.bf16.msra.mxu0 %v1399
    %1421 = vmatprep.subr.bf16.mxu0 0
    %1422 = vmatpush1.bf16.msra.mxu0 %v1398
    %1423 = vmatprep.subr.bf16.mxu0 0
    %1424 = vmatpush1.bf16.msra.mxu0 %v1397
    %1425 = vmatprep.subr.bf16.mxu0 0
    %1426 = vmatpush1.bf16.msra.mxu0 %v1396
    %1427 = vmatprep.subr.bf16.mxu0 0
    %1428 = vmatpush2.bf16.msra.mxu0 0
    %1429 = vmatprep.subr.bf16.mxu0 0
    %1430 = vmatpush2.bf16.msra.mxu0 0
    %1431 = vmatprep.subr.bf16.mxu0 0
    %1432 = vmatpush2.bf16.msra.mxu0 0
    %1433 = vmatprep.subr.bf16.mxu0 0
    %1434 = vmatpush2.bf16.msra.mxu0 0
    %1435 = vmatprep.subr.bf16.mxu0 0
    %1436 = vmatpush2.bf16.msra.mxu0 0
    %1437 = vmatprep.subr.bf16.mxu0 0
    %1438 = vmatpush2.bf16.msra.mxu0 0
    %1439 = vmatprep.subr.bf16.mxu0 0
    %1440 = vmatpush2.bf16.msra.mxu0 0
    %1441 = vmatprep.subr.bf16.mxu0 0
    %1442 = vmatpush2.bf16.msra.mxu0 0
    %1443 = vmatprep.mubr.bf16.mxu0 0
    %1444 = vmatmul.mubr.bf16.gmra.mxu0 %v1409
    %v1445 = vpop.f32.mrf.mxu0
    %v1446 = vadd.f32 %v1371, %v1445
    %v1447 = vpop.f32.mrf.mxu0
    %v1448 = vpop.f32.mrf.mxu0
    %v1449 = vpop.f32.mrf.mxu0
    %1450 = vdwg.mxu0
    %v1451 = vmax.f32 %v1446, 0.0
    %v1452 = vpack.c.bf16 %v1451, %v1451
    %v1453 = vld [vmem:[%s2 + $0x30] sm:$0xf]
    %v1454 = vld [vmem:[%s2 + $0x34] sm:$0xf]
    %v1455 = vld [vmem:[%s2 + $0x38] sm:$0xf]
    %v1456 = vld [vmem:[%s2 + $0x3c] sm:$0xf]
    %v1457 = vld [vmem:[%s3 + $0x5] sm:$0x1]
    %v1458 = vlaneseq
    %v1459 = vshrl.u32 %v1458, 7
    %v1460 = vsub.s32 0, %v1459
    %v1461 = vrot.slane %v1457, %v1460
    %v1466 = vunpack.c.l.b16 %v1453
    %v1467 = vunpack.c.l.b16 %v1454
    %v1468 = vunpack.c.l.b16 %v1455
    %v1469 = vunpack.c.l.b16 %v1456
    %v1470 = vpack.c.b16 %v1467, %v1466
    %v1471 = vpack.c.b16 %v1469, %v1468
    %vm1474 = vcmask 261120
    %v1476 = vsel %vm1474, %v1452, 0
    %1478 = vmatprep.subr.bf16.mxu0 0
    %1479 = vmatpush1.bf16.msra.mxu0 0
    %1480 = vmatprep.subr.bf16.mxu0 0
    %1481 = vmatpush1.bf16.msra.mxu0 0
    %1482 = vmatprep.subr.bf16.mxu0 0
    %1483 = vmatpush1.bf16.msra.mxu0 0
    %1484 = vmatprep.subr.bf16.mxu0 0
    %1485 = vmatpush1.bf16.msra.mxu0 0
    %1486 = vmatprep.subr.bf16.mxu0 0
    %1487 = vmatpush1.bf16.msra.mxu0 0
    %1488 = vmatprep.subr.bf16.mxu0 0
    %1489 = vmatpush1.bf16.msra.mxu0 0
    %1490 = vmatprep.subr.bf16.mxu0 0
    %1491 = vmatpush1.bf16.msra.mxu0 %v1471
    %1492 = vmatprep.subr.bf16.mxu0 0
    %1493 = vmatpush1.bf16.msra.mxu0 %v1470
    %1494 = vmatprep.subr.bf16.mxu0 0
    %1495 = vmatpush2.bf16.msra.mxu0 0
    %1496 = vmatprep.subr.bf16.mxu0 0
    %1497 = vmatpush2.bf16.msra.mxu0 0
    %1498 = vmatprep.subr.bf16.mxu0 0
    %1499 = vmatpush2.bf16.msra.mxu0 0
    %1500 = vmatprep.subr.bf16.mxu0 0
    %1501 = vmatpush2.bf16.msra.mxu0 0
    %1502 = vmatprep.subr.bf16.mxu0 0
    %1503 = vmatpush2.bf16.msra.mxu0 0
    %1504 = vmatprep.subr.bf16.mxu0 0
    %1505 = vmatpush2.bf16.msra.mxu0 0
    %1506 = vmatprep.subr.bf16.mxu0 0
    %1507 = vmatpush2.bf16.msra.mxu0 0
    %1508 = vmatprep.subr.bf16.mxu0 0
    %1509 = vmatpush2.bf16.msra.mxu0 0
    %1510 = vmatprep.mubr.bf16.mxu0 0
    %1511 = vmatmul.mubr.bf16.gmra.mxu0 %v1476
    %v1512 = vpop.f32.mrf.mxu0
    %v1513 = vadd.f32 %v1461, %v1512
    %v1514 = vpop.f32.mrf.mxu0
    %v1515 = vpop.f32.mrf.mxu0
    %v1516 = vpop.f32.mrf.mxu0
    %1517 = vdwg.mxu0
    %v1518 = vmax.f32 %v1513, 0.0
    %v1519 = vpack.c.bf16 %v1518, %v1518
    %v1520 = vld [vmem:[%s2 + $0x40] sm:$0xf]
    %v1521 = vld [vmem:[%s2 + $0x44] sm:$0xf]
    %v1522 = vld [vmem:[%s2 + $0x48] sm:$0xf]
    %v1523 = vld [vmem:[%s2 + $0x4c] sm:$0xf]
    %v1524 = vld [vmem:[%s3 + $0x6] sm:$0x1]
    %v1525 = vlaneseq
    %v1526 = vshrl.u32 %v1525, 7
    %v1527 = vsub.s32 0, %v1526
    %v1528 = vrot.slane %v1524, %v1527
    %v1533 = vunpack.c.l.b16 %v1520
    %v1534 = vunpack.c.l.b16 %v1521
    %v1535 = vunpack.c.l.b16 %v1522
    %v1536 = vunpack.c.l.b16 %v1523
    %v1537 = vpack.c.b16 %v1534, %v1533
    %v1538 = vpack.c.b16 %v1536, %v1535
    %v1542 = vsel %vm1474, %v1519, 0
    %1544 = vmatprep.subr.bf16.mxu0 0
    %1545 = vmatpush1.bf16.msra.mxu0 0
    %1546 = vmatprep.subr.bf16.mxu0 0
    %1547 = vmatpush1.bf16.msra.mxu0 0
    %1548 = vmatprep.subr.bf16.mxu0 0
    %1549 = vmatpush1.bf16.msra.mxu0 0
    %1550 = vmatprep.subr.bf16.mxu0 0
    %1551 = vmatpush1.bf16.msra.mxu0 0
    %1552 = vmatprep.subr.bf16.mxu0 0
    %1553 = vmatpush1.bf16.msra.mxu0 0
    %1554 = vmatprep.subr.bf16.mxu0 0
    %1555 = vmatpush1.bf16.msra.mxu0 0
    %1556 = vmatprep.subr.bf16.mxu0 0
    %1557 = vmatpush1.bf16.msra.mxu0 %v1538
    %1558 = vmatprep.subr.bf16.mxu0 0
    %1559 = vmatpush1.bf16.msra.mxu0 %v1537
    %1560 = vmatprep.subr.bf16.mxu0 0
    %1561 = vmatpush2.bf16.msra.mxu0 0
    %1562 = vmatprep.subr.bf16.mxu0 0
    %1563 = vmatpush2.bf16.msra.mxu0 0
    %1564 = vmatprep.subr.bf16.mxu0 0
    %1565 = vmatpush2.bf16.msra.mxu0 0
    %1566 = vmatprep.subr.bf16.mxu0 0
    %1567 = vmatpush2.bf16.msra.mxu0 0
    %1568 = vmatprep.subr.bf16.mxu0 0
    %1569 = vmatpush2.bf16.msra.mxu0 0
    %1570 = vmatprep.subr.bf16.mxu0 0
    %1571 = vmatpush2.bf16.msra.mxu0 0
    %1572 = vmatprep.subr.bf16.mxu0 0
    %1573 = vmatpush2.bf16.msra.mxu0 0
    %1574 = vmatprep.subr.bf16.mxu0 0
    %1575 = vmatpush2.bf16.msra.mxu0 0
    %1576 = vmatprep.mubr.bf16.mxu0 0
    %1577 = vmatmul.mubr.bf16.gmra.mxu0 %v1542
    %v1578 = vpop.f32.mrf.mxu0
    %v1579 = vadd.f32 %v1528, %v1578
    %v1580 = vpop.f32.mrf.mxu0
    %v1581 = vpop.f32.mrf.mxu0
    %v1582 = vpop.f32.mrf.mxu0
    %1583 = vdwg.mxu0
    %vm1584 = vcmask 254976
    %1585 = vst.msk [vmem:[#allocation2] sm:$0x3] %vm1584, %v1579
    // Predicated region
    $region18: #{textcnn_forward.1} parent=1 // pred_check
      _
    $region19: #{textcnn_forward.1} parent=1 // pred_check_branch
      %1587 = sbr.rel (0) target = $region21
    $region20: #{textcnn_forward.1} parent=1 // pred_region
      %s1589 = ssub.s32 32, 32
      %1590 = vsyncadd [#allocation3], %s1589
      %s1592 = sshll.u32 [#allocation2], 4
      %s1593 = int_to_ptr.vmem [resolvable:$true] %s1592
      %1595 = dma.vmem_to_hbm [thread:$0]  %s1593, 32, %s4, [#allocation3]
    $region21: #{textcnn_forward.1} parent=1 // pred_fallthru
      _
    // Predicated region
    $region22: #{textcnn_forward.1} parent=1 // pred_check
      _
    $region23: #{textcnn_forward.1} parent=1 // pred_check_branch
      %1597 = sbr.rel (0) target = $region25
    $region24: #{textcnn_forward.1} parent=1 // pred_region
      %1598 = dma.done [#allocation3], 32
    $region25: #{textcnn_forward.1} parent=1 // pred_fallthru
      _
    %1599 = vsyncpa [#allocation3], 1

</llo_original>
